<compile_context>
chip_gen: v6e
topology: v6e:2x2x1
jax: 0.10.0
libtpu: 0.0.40
codegen_flags: <defaults>
</compile_context>

<pallas_src>
import math

import jax
import jax.numpy as jnp
from jax import lax
from jax.experimental import pallas as pl
from jax.experimental.pallas import tpu as pltpu


def _round_up(x, m):
    return ((x + m - 1) // m) * m


def _fused_cross_conv_kernel(
    bl_ref,     # [tm, 1]      int32  graph ids of this left-node tile (pad = -1)
    br_ref,     # [1, Nr]      int32  graph ids of all right nodes     (pad = -2)
    cl_ref,     # [tm, 1]      f32    #same-graph right nodes per left node (pad 0)
    cr_ref,     # [Nr, 1]      f32    #same-graph left nodes per right node (pad 0)
    xl_ref,     # [tm, F]      f32    left-node feature tile
    xrs_t_ref,  # [F,  Nr]     mm     right features, row-normalized, transposed
    xr_mm_ref,  # [Nr, F]      mm     right features (matmul dtype)
    xr_ref,     # [Nr, F]      f32    right features (epilogue)
    w2t_ref,    # [F,  O]      f32    squared weight, transposed, zero-padded
    out1_ref,   # [tm, O]      f32    direction-1 output tile (targets = left)
    out2_ref,   # [Nr, O]      f32    direction-2 output (targets = right)
    g2s_acc,    # VMEM [Nr, F+1] f32  dir-2 aggregate; last column = coef col-sums
):
    i = pl.program_id(0)
    last = pl.num_programs(0) - 1
    mm_dtype = xrs_t_ref.dtype

    @pl.when(i == 0)
    def _():
        g2s_acc[...] = jnp.zeros_like(g2s_acc)

    xl = xl_ref[...]
    tm, f = xl.shape
    nr = xr_ref.shape[0]

    contract = (((1,), (0,)), ((), ()))        # standard [M, K] x [K, N]
    contract_first = (((0,), (0,)), ((), ()))  # lhs^T @ rhs

    # Cosine similarity: left rows scaled by inverse norm (EUP rsqrt), right side
    # pre-scaled/transposed in the wrapper -> one MXU matmul yields cos(x_i, x_j).
    inv_nl = lax.rsqrt(jnp.sum(xl * xl, axis=-1, keepdims=True) + 1e-12)   # [tm, 1]
    cos = lax.dot_general((xl * inv_nl).astype(mm_dtype), xrs_t_ref[...],
                          contract, preferred_element_type=jnp.float32)   # [tm, Nr]

    # relu + block-diagonal cross-graph mask fused into one select.
    coef = jnp.where(bl_ref[...] == br_ref[...], jnp.maximum(cos, 0.0), 0.0)
    coef_mm = coef.astype(mm_dtype)

    # ---------------- direction 1: targets = this left-node tile ----------------
    # coef_sum = sum_j coef_ij + 1e-6 * (#same-graph right nodes); this matches
    # the reference's scatter(coef + 1e-6) without materializing coef + eps*mask.
    sum1 = jnp.sum(coef, axis=-1, keepdims=True) + 1e-6 * cl_ref[...]      # [tm, 1]
    inv1 = pl.reciprocal(jnp.maximum(sum1, 1e-30), approx=True)            # EUP
    g1 = lax.dot_general(coef_mm, xr_mm_ref[...], contract,
                         preferred_element_type=jnp.float32) * inv1        # [tm, F]

    # Fused w^2 epilogue: one [3*tm, F] x [F, O] matmul instead of three.
    rows1 = jnp.concatenate([xl * g1, xl * xl, g1 * g1], axis=0)           # [3tm, F]
    p1 = lax.dot_general(rows1, w2t_ref[...], contract,
                         preferred_element_type=jnp.float32)               # [3tm, O]
    num1 = p1[:tm]
    den1 = (p1[tm:2 * tm] + 1e-6) * (p1[2 * tm:] + 1e-6)
    out1_ref[...] = (num1 * lax.rsqrt(den1)).astype(out1_ref.dtype)

    # ------- direction 2: accumulate over left tiles (targets = right nodes) -----
    # A ones column appended to xl makes the last output column the per-right-node
    # column-sum of coef, removing the former N=1 matmul.
    xl_aug = jnp.concatenate(
        [xl.astype(mm_dtype), jnp.ones((tm, 1), mm_dtype)], axis=1)        # [tm, F+1]
    g2s_acc[...] += lax.dot_general(coef_mm, xl_aug, contract_first,
                                    preferred_element_type=jnp.float32)    # [Nr, F+1]

    @pl.when(i == last)
    def _():
        xr = xr_ref[...]
        acc = g2s_acc[...]
        s2 = acc[:, f:] + 1e-6 * cr_ref[...]                               # [Nr, 1]
        inv2 = pl.reciprocal(jnp.maximum(s2, 1e-30), approx=True)
        g2 = acc[:, :f] * inv2                                             # [Nr, F]
        rows2 = jnp.concatenate([xr * g2, xr * xr, g2 * g2], axis=0)       # [3Nr, F]
        p2 = lax.dot_general(rows2, w2t_ref[...], contract,
                             preferred_element_type=jnp.float32)           # [3Nr, O]
        num2 = p2[:nr]
        den2 = (p2[nr:2 * nr] + 1e-6) * (p2[2 * nr:] + 1e-6)
        out2_ref[...] = (num2 * lax.rsqrt(den2)).astype(out2_ref.dtype)


def cross_graph_convolution(x_left, batch_left, x_right, batch_right, weight, *,
                            tile_m=256, matmul_dtype=jnp.bfloat16):
    """Matches CrossGraphConvolution.forward -> (out1, out2).

    out1: [N_left,  out_nhid]  (targets = left nodes,  sources = right nodes)
    out2: [N_right, out_nhid]  (targets = right nodes, sources = left nodes)
    """
    nl, f = x_left.shape
    nr = x_right.shape[0]
    o = weight.shape[0]
    f32 = jnp.float32

    # Left (target) tiling: sublane-aligned; small inputs collapse to one tile.
    # (On v6e/v5e with large VMEM this can be raised toward 512-1024.)
    tile_m = max(8, _round_up(int(tile_m), 8))
    nl_pad = _round_up(nl, 8)
    if nl_pad <= tile_m:
        tm = nl_pad
    else:
        tm = tile_m
        nl_pad = _round_up(nl_pad, tm)
    # Lane-dense padding for the dominant [tm, Nr] intermediate and the outputs.
    nr_pad = _round_up(max(nr, 1), 128)
    o_pad = _round_up(o, 128)

    xl = jnp.pad(x_left.astype(f32), ((0, nl_pad - nl), (0, 0)))
    xr = jnp.pad(x_right.astype(f32), ((0, nr_pad - nr), (0, 0)))
    # Sentinel graph ids for pad rows/cols (-1 vs -2 so pads never match anything
    # real, or each other) -> padded entries always produce coef = 0.
    bl = jnp.pad(batch_left.astype(jnp.int32), (0, nl_pad - nl),
                 constant_values=-1).reshape(nl_pad, 1)
    br = jnp.pad(batch_right.astype(jnp.int32), (0, nr_pad - nr),
                 constant_values=-2).reshape(1, nr_pad)

    # Per-node same-graph partner counts (the reference's scatter(coef + 1e-6)
    # adds 1e-6 once per same-graph partner).  Needs a static graph count, so
    # this wrapper expects concrete (non-traced) batch vectors.
    n_graphs = int(jnp.maximum(jnp.max(batch_left), jnp.max(batch_right))) + 1
    right_per_graph = jnp.bincount(batch_right.astype(jnp.int32),
                                   length=n_graphs).astype(f32)
    left_per_graph = jnp.bincount(batch_left.astype(jnp.int32),
                                  length=n_graphs).astype(f32)
    cl = jnp.pad(right_per_graph[batch_left], (0, nl_pad - nl)).reshape(nl_pad, 1)
    cr = jnp.pad(left_per_graph[batch_right], (0, nr_pad - nr)).reshape(nr_pad, 1)

    # Hoisted right-side normalization: scaled + transposed copy is the resident
    # RHS of the cosine matmul (computed once, reused by every grid step).
    inv_nr = lax.rsqrt(jnp.sum(xr * xr, axis=-1, keepdims=True) + 1e-12)
    xrs_t = (xr * inv_nr).T.astype(matmul_dtype)     # [F, Nr]
    xr_mm = xr.astype(matmul_dtype)                  # [Nr, F]

    # Squared weight, transposed and zero-padded to a lane-dense [F, 128] RHS.
    w2t = jnp.pad(jnp.square(weight.astype(f32)).T, ((0, 0), (0, o_pad - o)))

    grid = (nl_pad // tm,)
    out1, out2 = pl.pallas_call(
        _fused_cross_conv_kernel,
        out_shape=(
            jax.ShapeDtypeStruct((nl_pad, o_pad), f32),
            jax.ShapeDtypeStruct((nr_pad, o_pad), f32),
        ),
        grid=grid,
        in_specs=[
            pl.BlockSpec((tm, 1), lambda i: (i, 0)),          # bl    (tiled)
            pl.BlockSpec((1, nr_pad), lambda i: (0, 0)),      # br    (resident)
            pl.BlockSpec((tm, 1), lambda i: (i, 0)),          # cl    (tiled)
            pl.BlockSpec((nr_pad, 1), lambda i: (0, 0)),      # cr    (resident)
            pl.BlockSpec((tm, f), lambda i: (i, 0)),          # xl    (tiled)
            pl.BlockSpec((f, nr_pad), lambda i: (0, 0)),      # xrs_t (resident)
            pl.BlockSpec((nr_pad, f), lambda i: (0, 0)),      # xr_mm (resident)
            pl.BlockSpec((nr_pad, f), lambda i: (0, 0)),      # xr    (resident)
            pl.BlockSpec((f, o_pad), lambda i: (0, 0)),       # w2t   (resident)
        ],
        out_specs=(
            pl.BlockSpec((tm, o_pad), lambda i: (i, 0)),      # out1 tile per step
            pl.BlockSpec((nr_pad, o_pad), lambda i: (0, 0)),  # out2 (last step)
        ),
        scratch_shapes=[
            pltpu.VMEM((nr_pad, f + 1), jnp.float32),         # g2 + colsum carry
        ],
        compiler_params=pltpu.CompilerParams(
            dimension_semantics=("arbitrary",),               # dir-2 acc carries
            vmem_limit_bytes=64 * 1024 * 1024),               # v7x 64 MiB budget
    )(bl, br, cl, cr, xl, xrs_t, xr_mm, xr, w2t)

    return out1[:nl, :o], out2[:nr, :o]


# ----------------------------- pure-JAX reference -----------------------------
def _reference_one_side(x_tgt, batch_tgt, x_src, batch_src, weight):
    xt = x_tgt.astype(jnp.float32)
    xs = x_src.astype(jnp.float32)
    mask = (batch_tgt[:, None] == batch_src[None, :]).astype(jnp.float32)
    dots = xt @ xs.T
    nt = jnp.linalg.norm(xt, axis=-1, keepdims=True)
    ns = jnp.linalg.norm(xs, axis=-1, keepdims=True)
    coef = jnp.maximum(dots / jnp.maximum(nt * ns.T, 1e-6), 0.0) * mask
    coef_sum = jnp.sum(coef + 1e-6 * mask, axis=-1, keepdims=True)
    g = (coef / coef_sum) @ xs
    w = weight.astype(jnp.float32)
    t_w = xt[:, None, :] * w[None]
    g_w = g[:, None, :] * w[None]
    num = jnp.sum(t_w * g_w, axis=-1)
    dt = jnp.sqrt(jnp.sum(jnp.square(t_w), axis=-1) + 1e-6)
    dg = jnp.sqrt(jnp.sum(jnp.square(g_w), axis=-1) + 1e-6)
    return num / jnp.maximum(dt * dg, 1e-6)


if __name__ == "__main__":
    in_nhid = 32     # feature dim of node embeddings
    out_nhid = 16    # output channels of the cross conv
    n_left, n_right = 24, 20

    key = jax.random.PRNGKey(0)
    k_w, k_l, k_r = jax.random.split(key, 3)

    # Xavier-uniform init for weight [out_nhid, in_nhid] (deterministic).
    bound = math.sqrt(6.0 / (in_nhid + out_nhid))
    weight = jax.random.uniform(k_w, (out_nhid, in_nhid), jnp.float32, -bound, bound)

    x_left = jax.random.normal(k_l, (n_left, in_nhid), jnp.float32)
    x_right = jax.random.normal(k_r, (n_right, in_nhid), jnp.float32)
    # Two graphs, sorted/contiguous batch vectors (standard PyG convention).
    batch_left = jnp.concatenate([jnp.zeros(12, jnp.int32), jnp.ones(12, jnp.int32)])
    batch_right = jnp.concatenate([jnp.zeros(10, jnp.int32), jnp.ones(10, jnp.int32)])

    ref1 = _reference_one_side(x_left, batch_left, x_right, batch_right, weight)
    ref2 = _reference_one_side(x_right, batch_right, x_left, batch_left, weight)

    # f32 MXU path: tight tolerance against the pure-JAX reference.
    o1, o2 = cross_graph_convolution(x_left, batch_left, x_right, batch_right,
                                     weight, matmul_dtype=jnp.float32)
    jax.block_until_ready((o1, o2))
    assert o1.shape == (n_left, out_nhid) and o2.shape == (n_right, out_nhid)
    assert jnp.allclose(o1, ref1, atol=2e-3, rtol=2e-3)
    assert jnp.allclose(o2, ref2, atol=2e-3, rtol=2e-3)

    # Default bf16-MXU / f32-accumulate path, single left tile.
    b1, b2 = cross_graph_convolution(x_left, batch_left, x_right, batch_right, weight)
    jax.block_until_ready((b1, b2))
    assert jnp.allclose(b1, ref1, atol=2e-2, rtol=2e-2)
    assert jnp.allclose(b2, ref2, atol=2e-2, rtol=2e-2)

    # Multi-tile path: tiny left tiles exercise the grid, the carried direction-2
    # accumulator, and the pl.when(last) finalize.
    t1, t2 = cross_graph_convolution(x_left, batch_left, x_right, batch_right,
                                     weight, tile_m=8)
    jax.block_until_ready((t1, t2))
    assert jnp.allclose(t1, ref1, atol=2e-2, rtol=2e-2)
    assert jnp.allclose(t2, ref2, atol=2e-2, rtol=2e-2)

    print("KERNEL_OK")
</pallas_src>

<mosaic_0001>
module attributes {stable_mosaic.version = 11 : i64} {
  func.func @_fused_cross_conv_kernel(%arg0: i32, %arg1: memref<24x1xi32, #tpu.memory_space<vmem>>, %arg2: memref<1x128xi32, #tpu.memory_space<vmem>>, %arg3: memref<24x1xf32, #tpu.memory_space<vmem>>, %arg4: memref<128x1xf32, #tpu.memory_space<vmem>>, %arg5: memref<24x32xf32, #tpu.memory_space<vmem>>, %arg6: memref<32x128xf32, #tpu.memory_space<vmem>>, %arg7: memref<128x32xf32, #tpu.memory_space<vmem>>, %arg8: memref<128x32xf32, #tpu.memory_space<vmem>>, %arg9: memref<32x128xf32, #tpu.memory_space<vmem>>, %arg10: memref<24x128xf32, #tpu.memory_space<vmem>>, %arg11: memref<128x128xf32, #tpu.memory_space<vmem>>, %arg12: memref<128x33xf32, #tpu.memory_space<vmem>>) attributes {dimension_semantics = [#tpu.dimension_semantics<arbitrary>], iteration_bounds = array<i64: 1>, scalar_prefetch = 0 : i64, scratch_operands = 1 : i64, tpu.core_type = #tpu.core_type<tc>, window_params = [{transform_indices = @transform_0, window_bounds = array<i64: 24, 1>}, {pipeline_mode = #tpu.pipeline_mode<synchronous>, transform_indices = @transform_1, window_bounds = array<i64: 1, 128>}, {transform_indices = @transform_2, window_bounds = array<i64: 24, 1>}, {pipeline_mode = #tpu.pipeline_mode<synchronous>, transform_indices = @transform_3, window_bounds = array<i64: 128, 1>}, {transform_indices = @transform_4, window_bounds = array<i64: 24, 32>}, {pipeline_mode = #tpu.pipeline_mode<synchronous>, transform_indices = @transform_5, window_bounds = array<i64: 32, 128>}, {pipeline_mode = #tpu.pipeline_mode<synchronous>, transform_indices = @transform_6, window_bounds = array<i64: 128, 32>}, {pipeline_mode = #tpu.pipeline_mode<synchronous>, transform_indices = @transform_7, window_bounds = array<i64: 128, 32>}, {pipeline_mode = #tpu.pipeline_mode<synchronous>, transform_indices = @transform_8, window_bounds = array<i64: 32, 128>}, {transform_indices = @transform_9, window_bounds = array<i64: 24, 128>}, {pipeline_mode = #tpu.pipeline_mode<synchronous>, transform_indices = @transform_10, window_bounds = array<i64: 128, 128>}]} {
    %c0_i32 = arith.constant 0 : i32
    %0 = arith.cmpi eq, %arg0, %c0_i32 : i32
    %1 = arith.extui %0 : i1 to i32
    %c0_i32_0 = arith.constant 0 : i32
    %2 = arith.cmpi ne, %1, %c0_i32_0 : i32
    scf.if %2 {
      %cst_35 = arith.constant 0.000000e+00 : f32
      %62 = vector.broadcast %cst_35 : f32 to vector<128x33xf32>
      %c0_36 = arith.constant 0 : index
      %c0_37 = arith.constant 0 : index
      %63 = vector.load %arg12[%c0_36, %c0_37] : memref<128x33xf32, #tpu.memory_space<vmem>>, vector<128x33xf32>
      tpu.vector_store %arg12[%c0_36, %c0_37], %62 {strides = array<i32>} : memref<128x33xf32, #tpu.memory_space<vmem>>, vector<128x33xf32>,
    } else {
    }
    %c0 = arith.constant 0 : index
    %c0_1 = arith.constant 0 : index
    %3 = vector.load %arg5[%c0, %c0_1] : memref<24x32xf32, #tpu.memory_space<vmem>>, vector<24x32xf32>
    %4 = arith.mulf %3, %3 : vector<24x32xf32>
    %cst = arith.constant dense<0.000000e+00> : vector<24xf32>
    %5 = vector.multi_reduction <add>, %4, %cst [1] : vector<24x32xf32> to vector<24xf32>
    %6 = vector.shape_cast %5 : vector<24xf32> to vector<24x1xf32>
    %cst_2 = arith.constant 9.99999996E-13 : f32
    %7 = vector.broadcast %cst_2 : f32 to vector<24x1xf32>
    %8 = arith.addf %6, %7 : vector<24x1xf32>
    %9 = math.rsqrt %8 : vector<24x1xf32>
    %10 = vector.broadcast %9 : vector<24x1xf32> to vector<24x32xf32>
    %11 = arith.mulf %3, %10 : vector<24x32xf32>
    %c0_3 = arith.constant 0 : index
    %c0_4 = arith.constant 0 : index
    %12 = vector.load %arg6[%c0_3, %c0_4] : memref<32x128xf32, #tpu.memory_space<vmem>>, vector<32x128xf32>
    %cst_5 = arith.constant dense<0.000000e+00> : vector<24x128xf32>
    %13 = tpu.matmul %11, %12, %cst_5 {dimension_numbers = #tpu.dot_dimension_numbers<[1], [0], [0], [1], [0, 0, 1, 1], [], []>} : vector<24x32xf32>, vector<32x128xf32>, vector<24x128xf32> -> vector<24x128xf32>
    %c0_6 = arith.constant 0 : index
    %c0_7 = arith.constant 0 : index
    %14 = vector.load %arg1[%c0_6, %c0_7] : memref<24x1xi32, #tpu.memory_space<vmem>>, vector<24x1xi32>
    %c0_8 = arith.constant 0 : index
    %c0_9 = arith.constant 0 : index
    %15 = vector.load %arg2[%c0_8, %c0_9] : memref<1x128xi32, #tpu.memory_space<vmem>>, vector<1x128xi32>
    %16 = vector.broadcast %14 : vector<24x1xi32> to vector<24x128xi32>
    %17 = vector.broadcast %15 : vector<1x128xi32> to vector<24x128xi32>
    %18 = arith.cmpi eq, %16, %17 : vector<24x128xi32>
    %cst_10 = arith.constant 0.000000e+00 : f32
    %19 = vector.broadcast %cst_10 : f32 to vector<24x128xf32>
    %20 = arith.maximumf %13, %19 : vector<24x128xf32>
    %cst_11 = arith.constant 0.000000e+00 : f32
    %21 = vector.broadcast %cst_11 : f32 to vector<24x128xf32>
    %22 = arith.select %18, %20, %21 : vector<24x128xi1>, vector<24x128xf32>
    %cst_12 = arith.constant dense<0.000000e+00> : vector<24xf32>
    %23 = vector.multi_reduction <add>, %22, %cst_12 [1] : vector<24x128xf32> to vector<24xf32>
    %24 = vector.shape_cast %23 : vector<24xf32> to vector<24x1xf32>
    %c0_13 = arith.constant 0 : index
    %c0_14 = arith.constant 0 : index
    %25 = vector.load %arg3[%c0_13, %c0_14] : memref<24x1xf32, #tpu.memory_space<vmem>>, vector<24x1xf32>
    %cst_15 = arith.constant 9.99999997E-7 : f32
    %26 = vector.broadcast %cst_15 : f32 to vector<24x1xf32>
    %27 = arith.mulf %26, %25 : vector<24x1xf32>
    %28 = arith.addf %24, %27 : vector<24x1xf32>
    %cst_16 = arith.constant 1.000000e-30 : f32
    %29 = vector.broadcast %cst_16 : f32 to vector<24x1xf32>
    %30 = arith.maximumf %28, %29 : vector<24x1xf32>
    %31 = tpu.reciprocal %30 {approx = true} : vector<24x1xf32> -> vector<24x1xf32>
    %c0_17 = arith.constant 0 : index
    %c0_18 = arith.constant 0 : index
    %32 = vector.load %arg7[%c0_17, %c0_18] : memref<128x32xf32, #tpu.memory_space<vmem>>, vector<128x32xf32>
    %cst_19 = arith.constant dense<0.000000e+00> : vector<24x32xf32>
    %33 = tpu.matmul %22, %32, %cst_19 {dimension_numbers = #tpu.dot_dimension_numbers<[1], [0], [0], [1], [0, 0, 1, 1], [], []>} : vector<24x128xf32>, vector<128x32xf32>, vector<24x32xf32> -> vector<24x32xf32>
    %34 = vector.broadcast %31 : vector<24x1xf32> to vector<24x32xf32>
    %35 = arith.mulf %33, %34 : vector<24x32xf32>
    %36 = arith.mulf %3, %35 : vector<24x32xf32>
    %37 = arith.mulf %3, %3 : vector<24x32xf32>
    %38 = arith.mulf %35, %35 : vector<24x32xf32>
    %39 = tpu.concatenate %36, %37, %38 in 0 : vector<24x32xf32>, vector<24x32xf32>, vector<24x32xf32> -> vector<72x32xf32>
    %c0_20 = arith.constant 0 : index
    %c0_21 = arith.constant 0 : index
    %40 = vector.load %arg9[%c0_20, %c0_21] : memref<32x128xf32, #tpu.memory_space<vmem>>, vector<32x128xf32>
    %cst_22 = arith.constant dense<0.000000e+00> : vector<72x128xf32>
    %41 = tpu.matmul %39, %40, %cst_22 {dimension_numbers = #tpu.dot_dimension_numbers<[1], [0], [0], [1], [0, 0, 1, 1], [], []>} : vector<72x32xf32>, vector<32x128xf32>, vector<72x128xf32> -> vector<72x128xf32>
    %42 = vector.extract_strided_slice %41 {offsets = [0, 0], sizes = [24, 128], strides = [1, 1]} : vector<72x128xf32> to vector<24x128xf32>
    %43 = vector.extract_strided_slice %41 {offsets = [24, 0], sizes = [24, 128], strides = [1, 1]} : vector<72x128xf32> to vector<24x128xf32>
    %cst_23 = arith.constant 9.99999997E-7 : f32
    %44 = vector.broadcast %cst_23 : f32 to vector<24x128xf32>
    %45 = arith.addf %43, %44 : vector<24x128xf32>
    %46 = vector.extract_strided_slice %41 {offsets = [48, 0], sizes = [24, 128], strides = [1, 1]} : vector<72x128xf32> to vector<24x128xf32>
    %cst_24 = arith.constant 9.99999997E-7 : f32
    %47 = vector.broadcast %cst_24 : f32 to vector<24x128xf32>
    %48 = arith.addf %46, %47 : vector<24x128xf32>
    %49 = arith.mulf %45, %48 : vector<24x128xf32>
    %50 = math.rsqrt %49 : vector<24x128xf32>
    %51 = arith.mulf %42, %50 : vector<24x128xf32>
    %c0_25 = arith.constant 0 : index
    %c0_26 = arith.constant 0 : index
    %52 = vector.load %arg10[%c0_25, %c0_26] : memref<24x128xf32, #tpu.memory_space<vmem>>, vector<24x128xf32>
    tpu.vector_store %arg10[%c0_25, %c0_26], %51 {strides = array<i32>} : memref<24x128xf32, #tpu.memory_space<vmem>>, vector<24x128xf32>,
    %cst_27 = arith.constant 1.000000e+00 : f32
    %53 = vector.broadcast %cst_27 : f32 to vector<24x1xf32>
    %54 = tpu.concatenate %3, %53 in 1 : vector<24x32xf32>, vector<24x1xf32> -> vector<24x33xf32>
    %c0_28 = arith.constant 0 : index
    %c0_29 = arith.constant 0 : index
    %55 = vector.load %arg12[%c0_28, %c0_29] : memref<128x33xf32, #tpu.memory_space<vmem>>, vector<128x33xf32>
    %cst_30 = arith.constant dense<0.000000e+00> : vector<128x33xf32>
    %56 = tpu.matmul %22, %54, %cst_30 {dimension_numbers = #tpu.dot_dimension_numbers<[0], [0], [1], [1], [0, 1, 1, 1], [], []>} : vector<24x128xf32>, vector<24x33xf32>, vector<128x33xf32> -> vector<128x33xf32>
    %57 = arith.addf %55, %56 : vector<128x33xf32>
    %c0_31 = arith.constant 0 : index
    %c0_32 = arith.constant 0 : index
    %58 = vector.load %arg12[%c0_31, %c0_32] : memref<128x33xf32, #tpu.memory_space<vmem>>, vector<128x33xf32>
    tpu.vector_store %arg12[%c0_31, %c0_32], %57 {strides = array<i32>} : memref<128x33xf32, #tpu.memory_space<vmem>>, vector<128x33xf32>,
    %c0_i32_33 = arith.constant 0 : i32
    %59 = arith.cmpi eq, %arg0, %c0_i32_33 : i32
    %60 = arith.extui %59 : i1 to i32
    %c0_i32_34 = arith.constant 0 : i32
    %61 = arith.cmpi ne, %60, %c0_i32_34 : i32
    scf.if %61 {
      %c0_35 = arith.constant 0 : index
      %c0_36 = arith.constant 0 : index
      %62 = vector.load %arg8[%c0_35, %c0_36] : memref<128x32xf32, #tpu.memory_space<vmem>>, vector<128x32xf32>
      %c0_37 = arith.constant 0 : index
      %c0_38 = arith.constant 0 : index
      %63 = vector.load %arg12[%c0_37, %c0_38] : memref<128x33xf32, #tpu.memory_space<vmem>>, vector<128x33xf32>
      %64 = vector.extract_strided_slice %63 {offsets = [0, 32], sizes = [128, 1], strides = [1, 1]} : vector<128x33xf32> to vector<128x1xf32>
      %c0_39 = arith.constant 0 : index
      %c0_40 = arith.constant 0 : index
      %65 = vector.load %arg4[%c0_39, %c0_40] : memref<128x1xf32, #tpu.memory_space<vmem>>, vector<128x1xf32>
      %cst_41 = arith.constant 9.99999997E-7 : f32
      %66 = vector.broadcast %cst_41 : f32 to vector<128x1xf32>
      %67 = arith.mulf %66, %65 : vector<128x1xf32>
      %68 = arith.addf %64, %67 : vector<128x1xf32>
      %cst_42 = arith.constant 1.000000e-30 : f32
      %69 = vector.broadcast %cst_42 : f32 to vector<128x1xf32>
      %70 = arith.maximumf %68, %69 : vector<128x1xf32>
      %71 = tpu.reciprocal %70 {approx = true} : vector<128x1xf32> -> vector<128x1xf32>
      %72 = vector.extract_strided_slice %63 {offsets = [0, 0], sizes = [128, 32], strides = [1, 1]} : vector<128x33xf32> to vector<128x32xf32>
      %73 = vector.broadcast %71 : vector<128x1xf32> to vector<128x32xf32>
      %74 = arith.mulf %72, %73 : vector<128x32xf32>
      %75 = arith.mulf %62, %74 : vector<128x32xf32>
      %76 = arith.mulf %62, %62 : vector<128x32xf32>
      %77 = arith.mulf %74, %74 : vector<128x32xf32>
      %78 = tpu.concatenate %75, %76, %77 in 0 : vector<128x32xf32>, vector<128x32xf32>, vector<128x32xf32> -> vector<384x32xf32>
      %c0_43 = arith.constant 0 : index
      %c0_44 = arith.constant 0 : index
      %79 = vector.load %arg9[%c0_43, %c0_44] : memref<32x128xf32, #tpu.memory_space<vmem>>, vector<32x128xf32>
      %cst_45 = arith.constant dense<0.000000e+00> : vector<384x128xf32>
      %80 = tpu.matmul %78, %79, %cst_45 {dimension_numbers = #tpu.dot_dimension_numbers<[1], [0], [0], [1], [0, 0, 1, 1], [], []>} : vector<384x32xf32>, vector<32x128xf32>, vector<384x128xf32> -> vector<384x128xf32>
      %81 = vector.extract_strided_slice %80 {offsets = [0, 0], sizes = [128, 128], strides = [1, 1]} : vector<384x128xf32> to vector<128x128xf32>
      %82 = vector.extract_strided_slice %80 {offsets = [128, 0], sizes = [128, 128], strides = [1, 1]} : vector<384x128xf32> to vector<128x128xf32>
      %cst_46 = arith.constant 9.99999997E-7 : f32
      %83 = vector.broadcast %cst_46 : f32 to vector<128x128xf32>
      %84 = arith.addf %82, %83 : vector<128x128xf32>
      %85 = vector.extract_strided_slice %80 {offsets = [256, 0], sizes = [128, 128], strides = [1, 1]} : vector<384x128xf32> to vector<128x128xf32>
      %cst_47 = arith.constant 9.99999997E-7 : f32
      %86 = vector.broadcast %cst_47 : f32 to vector<128x128xf32>
      %87 = arith.addf %85, %86 : vector<128x128xf32>
      %88 = arith.mulf %84, %87 : vector<128x128xf32>
      %89 = math.rsqrt %88 : vector<128x128xf32>
      %90 = arith.mulf %81, %89 : vector<128x128xf32>
      %c0_48 = arith.constant 0 : index
      %c0_49 = arith.constant 0 : index
      %91 = vector.load %arg11[%c0_48, %c0_49] : memref<128x128xf32, #tpu.memory_space<vmem>>, vector<128x128xf32>
      tpu.vector_store %arg11[%c0_48, %c0_49], %90 {strides = array<i32>} : memref<128x128xf32, #tpu.memory_space<vmem>>, vector<128x128xf32>,
    } else {
    }
    return
  }
  func.func @transform_0(%arg0: i32) -> (i32, i32) {
    %c0_i32 = arith.constant 0 : i32
    %c0_i32_0 = arith.constant 0 : i32
    return %arg0, %c0_i32 : i32, i32
  }
  func.func @transform_1(%arg0: i32) -> (i32, i32) {
    %c0_i32 = arith.constant 0 : i32
    %c0_i32_0 = arith.constant 0 : i32
    %c0_i32_1 = arith.constant 0 : i32
    return %c0_i32, %c0_i32_0 : i32, i32
  }
  func.func @transform_2(%arg0: i32) -> (i32, i32) {
    %c0_i32 = arith.constant 0 : i32
    %c0_i32_0 = arith.constant 0 : i32
    return %arg0, %c0_i32 : i32, i32
  }
  func.func @transform_3(%arg0: i32) -> (i32, i32) {
    %c0_i32 = arith.constant 0 : i32
    %c0_i32_0 = arith.constant 0 : i32
    %c0_i32_1 = arith.constant 0 : i32
    return %c0_i32, %c0_i32_0 : i32, i32
  }
  func.func @transform_4(%arg0: i32) -> (i32, i32) {
    %c0_i32 = arith.constant 0 : i32
    %c0_i32_0 = arith.constant 0 : i32
    return %arg0, %c0_i32 : i32, i32
  }
  func.func @transform_5(%arg0: i32) -> (i32, i32) {
    %c0_i32 = arith.constant 0 : i32
    %c0_i32_0 = arith.constant 0 : i32
    %c0_i32_1 = arith.constant 0 : i32
    return %c0_i32, %c0_i32_0 : i32, i32
  }
  func.func @transform_6(%arg0: i32) -> (i32, i32) {
    %c0_i32 = arith.constant 0 : i32
    %c0_i32_0 = arith.constant 0 : i32
    %c0_i32_1 = arith.constant 0 : i32
    return %c0_i32, %c0_i32_0 : i32, i32
  }
  func.func @transform_7(%arg0: i32) -> (i32, i32) {
    %c0_i32 = arith.constant 0 : i32
    %c0_i32_0 = arith.constant 0 : i32
    %c0_i32_1 = arith.constant 0 : i32
    return %c0_i32, %c0_i32_0 : i32, i32
  }
  func.func @transform_8(%arg0: i32) -> (i32, i32) {
    %c0_i32 = arith.constant 0 : i32
    %c0_i32_0 = arith.constant 0 : i32
    %c0_i32_1 = arith.constant 0 : i32
    return %c0_i32, %c0_i32_0 : i32, i32
  }
  func.func @transform_9(%arg0: i32) -> (i32, i32) {
    %c0_i32 = arith.constant 0 : i32
    %c0_i32_0 = arith.constant 0 : i32
    return %arg0, %c0_i32 : i32, i32
  }
  func.func @transform_10(%arg0: i32) -> (i32, i32) {
    %c0_i32 = arith.constant 0 : i32
    %c0_i32_0 = arith.constant 0 : i32
    %c0_i32_1 = arith.constant 0 : i32
    return %c0_i32, %c0_i32_0 : i32, i32
  }
}

</mosaic_0001>

<llo_original>
// kernel: tpu_custom_call.1
$region0: #{tpu_custom_call.1}
  #allocation0 [shape = 'u32[]', space=smem, size = 0x4, offset = 0x4, fixed_abs, tag = 'smem constant byte address 0x4 - core index']
  #allocation1 [shape = 'u32[144,128]{1,0:T(1,128)}', space=vmem, size = 0x12000, scoped, tag = 'internal scratch']
  #allocation2 [shape = 'f32[128,33]{1,0:T(8,128)}', space=vmem, size = 0x10000, scoped, tag = 'scratch operand']
  %s0 = inlined_call_operand.vmem [shape: s32[24,1], index: 0, kind: input, shape index: {}]
  %s1 = inlined_call_operand.vmem [shape: s32[1,128], index: 1, kind: input, shape index: {}]
  %s2 = inlined_call_operand.vmem [shape: f32[24,1], index: 2, kind: input, shape index: {}]
  %s3 = inlined_call_operand.vmem [shape: f32[128,1], index: 3, kind: input, shape index: {}]
  %s4 = inlined_call_operand.vmem [shape: f32[24,32], index: 4, kind: input, shape index: {}]
  %s5 = inlined_call_operand.vmem [shape: f32[32,128], index: 5, kind: input, shape index: {}]
  %s6 = inlined_call_operand.vmem [shape: f32[128,32], index: 6, kind: input, shape index: {}]
  %s7 = inlined_call_operand.vmem [shape: f32[128,32], index: 7, kind: input, shape index: {}]
  %s8 = inlined_call_operand.vmem [shape: f32[32,128], index: 8, kind: input, shape index: {}]
  %s9 = inlined_call_operand.hbm [shape: f32[24,128], index: 9, kind: output, shape index: {0}]
  %s10 = inlined_call_operand.hbm [shape: f32[128,128], index: 10, kind: output, shape index: {1}]
  %11 = xla_tuple %s9, %s10
  %s12 = sld [smem:[#allocation0]]
  $region62: #{tpu_custom_call.1} parent=0
    _
  %s14 = ssub.s32 1, %s12
  %s15 = scalar_select 0, %s14, %s12
  $region1: #{tpu_custom_call.1} parent=0
    #allocation3 [shape = 'u8[12288]{0}', space=vmem, size = 0x3000, scoped, tag = 'output window, operand 0, single buffered']
    #allocation4 [shape = 's32[1]{0}', space=sflag, size = 0x4, scoped, tag = 'scoped memory for tpu_custom_call.1']
    #allocation5 [shape = 'u8[65536]{0}', space=vmem, size = 0x10000, scoped, tag = 'output window, operand 1, single buffered']
    #allocation6 [shape = 's32[1]{0}', space=sflag, size = 0x4, scoped, tag = 'scoped memory for tpu_custom_call.1']
    %16 = vsyncpa [#allocation4], 0
    %17 = vsyncpa [#allocation6], 0
    // Predicated region
    $region2: #{tpu_custom_call.1} parent=1 // pred_check
      _
    $region3: #{tpu_custom_call.1} parent=1 // pred_check_branch
      %19 = sbr.rel (0) target = $region5
    $region4: #{tpu_custom_call.1} parent=1 // pred_region
      _
    $region5: #{tpu_custom_call.1} parent=1 // pred_fallthru
      _
    // Predicated region
    $region6: #{tpu_custom_call.1} parent=1 // pred_check
      _
    $region7: #{tpu_custom_call.1} parent=1 // pred_check_branch
      %21 = sbr.rel (0) target = $region9
    $region8: #{tpu_custom_call.1} parent=1 // pred_region
      _
    $region9: #{tpu_custom_call.1} parent=1 // pred_fallthru
      _
    // Predicated region
    $region10: #{tpu_custom_call.1} parent=1 // pred_check
      _
    $region11: #{tpu_custom_call.1} parent=1 // pred_check_branch
      %23 = sbr.rel (0) target = $region13
    $region12: #{tpu_custom_call.1} parent=1 // pred_region
      _
    $region13: #{tpu_custom_call.1} parent=1 // pred_fallthru
      _
    // Predicated region
    $region14: #{tpu_custom_call.1} parent=1 // pred_check
      _
    $region15: #{tpu_custom_call.1} parent=1 // pred_check_branch
      %25 = sbr.rel (0) target = $region17
    $region16: #{tpu_custom_call.1} parent=1 // pred_region
      _
    $region17: #{tpu_custom_call.1} parent=1 // pred_fallthru
      _
    // Predicated region
    $region18: #{tpu_custom_call.1} parent=1 // pred_check
      _
    $region19: #{tpu_custom_call.1} parent=1 // pred_check_branch
      %27 = sbr.rel (0) target = $region21
    $region20: #{tpu_custom_call.1} parent=1 // pred_region
      _
    $region21: #{tpu_custom_call.1} parent=1 // pred_fallthru
      _
    // Predicated region
    $region22: #{tpu_custom_call.1} parent=1 // pred_check
      _
    $region23: #{tpu_custom_call.1} parent=1 // pred_check_branch
      %29 = sbr.rel (0) target = $region25
    $region24: #{tpu_custom_call.1} parent=1 // pred_region
      _
    $region25: #{tpu_custom_call.1} parent=1 // pred_fallthru
      _
    // Predicated region
    $region26: #{tpu_custom_call.1} parent=1 // pred_check
      _
    $region27: #{tpu_custom_call.1} parent=1 // pred_check_branch
      %31 = sbr.rel (0) target = $region29
    $region28: #{tpu_custom_call.1} parent=1 // pred_region
      _
    $region29: #{tpu_custom_call.1} parent=1 // pred_fallthru
      _
    // Predicated region
    $region30: #{tpu_custom_call.1} parent=1 // pred_check
      _
    $region31: #{tpu_custom_call.1} parent=1 // pred_check_branch
      %33 = sbr.rel (0) target = $region33
    $region32: #{tpu_custom_call.1} parent=1 // pred_region
      _
    $region33: #{tpu_custom_call.1} parent=1 // pred_fallthru
      _
    // Predicated region
    $region34: #{tpu_custom_call.1} parent=1 // pred_check
      _
    $region35: #{tpu_custom_call.1} parent=1 // pred_check_branch
      %35 = sbr.rel (0) target = $region37
    $region36: #{tpu_custom_call.1} parent=1 // pred_region
      _
    $region37: #{tpu_custom_call.1} parent=1 // pred_fallthru
      _
    %p36 = scmp.eq.s32.totalorder 0, 0
    // Predicated region
    $region38: #{tpu_custom_call.1} parent=1 // pred_check
      %p37 = pneg %p36
    $region39: #{tpu_custom_call.1} parent=1 // pred_check_branch
      %39 = sbr.rel (%p37) target = $region41
    $region40: #{tpu_custom_call.1} parent=1 // pred_region
      %vm40 = vcmask 269312
      %41 = vst.msk [vmem:[#allocation2] sm:$0xff] %vm40, 0.0
      %42 = vst.msk [vmem:[#allocation2 + $0x8] sm:$0xff] %vm40, 0.0
      %43 = vst.msk [vmem:[#allocation2 + $0x10] sm:$0xff] %vm40, 0.0
      %44 = vst.msk [vmem:[#allocation2 + $0x18] sm:$0xff] %vm40, 0.0
      %45 = vst.msk [vmem:[#allocation2 + $0x20] sm:$0xff] %vm40, 0.0
      %46 = vst.msk [vmem:[#allocation2 + $0x28] sm:$0xff] %vm40, 0.0
      %47 = vst.msk [vmem:[#allocation2 + $0x30] sm:$0xff] %vm40, 0.0
      %48 = vst.msk [vmem:[#allocation2 + $0x38] sm:$0xff] %vm40, 0.0
      %49 = vst.msk [vmem:[#allocation2 + $0x40] sm:$0xff] %vm40, 0.0
      %50 = vst.msk [vmem:[#allocation2 + $0x48] sm:$0xff] %vm40, 0.0
      %51 = vst.msk [vmem:[#allocation2 + $0x50] sm:$0xff] %vm40, 0.0
      %52 = vst.msk [vmem:[#allocation2 + $0x58] sm:$0xff] %vm40, 0.0
      %53 = vst.msk [vmem:[#allocation2 + $0x60] sm:$0xff] %vm40, 0.0
      %54 = vst.msk [vmem:[#allocation2 + $0x68] sm:$0xff] %vm40, 0.0
      %55 = vst.msk [vmem:[#allocation2 + $0x70] sm:$0xff] %vm40, 0.0
      %56 = vst.msk [vmem:[#allocation2 + $0x78] sm:$0xff] %vm40, 0.0
    $region41: #{tpu_custom_call.1} parent=1 // pred_fallthru
      _
    %v57 = vld [vmem:[%s4] sm:$0xff]
    %v58 = vld [vmem:[%s4 + $0x8] sm:$0xff]
    %v59 = vld [vmem:[%s4 + $0x10] sm:$0xff]
    %v60 = vmul.f32 %v57, %v57
    %v61 = vmul.f32 %v58, %v58
    %v62 = vmul.f32 %v59, %v59
    %vm63 = vcmask 261120
    %v64 = vsel %vm63, %v60, 0.0
    %65 = vadd.xlane.f32.xlu0 %v64
    %v66 = vpop.xlane.xlu0 %65
    %v67 = vsel %vm63, %v61, 0.0
    %68 = vadd.xlane.f32.xlu0 %v67
    %v69 = vpop.xlane.xlu0 %68
    %v70 = vsel %vm63, %v62, 0.0
    %71 = vadd.xlane.f32.xlu0 %v70
    %v72 = vpop.xlane.xlu0 %71
    %v73 = vadd.f32 %v66, 1e-12
    %v74 = vadd.f32 %v69, 1e-12
    %v75 = vadd.f32 %v72, 1e-12
    %v76 = vrsqrt.pop %v73
    %v77 = vrsqrt.pop %v74
    %v78 = vrsqrt.pop %v75
    %v79 = vmul.f32 %v57, %v76
    %v80 = vmul.f32 %v58, %v77
    %v81 = vmul.f32 %v59, %v78
    %v82 = vld [vmem:[%s5] sm:$0xff]
    %v83 = vld [vmem:[%s5 + $0x8] sm:$0xff]
    %v84 = vld [vmem:[%s5 + $0x10] sm:$0xff]
    %v85 = vld [vmem:[%s5 + $0x18] sm:$0xff]
    %v87 = vsel %vm63, %v79, 0
    %v90 = vsel %vm63, %v80, 0
    %v93 = vsel %vm63, %v81, 0
    %95 = vmatprep.subr.mxu0 0.0
    %96 = vmatpush1.msra.mxu0 0.0
    %97 = vmatprep.subr.mxu0 0.0
    %98 = vmatpush1.msra.mxu0 0.0
    %99 = vmatprep.subr.mxu0 0.0
    %100 = vmatpush1.msra.mxu0 0.0
    %101 = vmatprep.subr.mxu0 0.0
    %102 = vmatpush1.msra.mxu0 0.0
    %103 = vmatprep.subr.mxu0 0.0
    %104 = vmatpush1.msra.mxu0 0.0
    %105 = vmatprep.subr.mxu0 0.0
    %106 = vmatpush1.msra.mxu0 0.0
    %107 = vmatprep.subr.mxu0 0.0
    %108 = vmatpush1.msra.mxu0 0.0
    %109 = vmatprep.subr.mxu0 0.0
    %110 = vmatpush1.msra.mxu0 0.0
    %111 = vmatprep.subr.mxu0 0.0
    %112 = vmatpush1.msra.mxu0 0.0
    %113 = vmatprep.subr.mxu0 0.0
    %114 = vmatpush1.msra.mxu0 0.0
    %115 = vmatprep.subr.mxu0 0.0
    %116 = vmatpush1.msra.mxu0 0.0
    %117 = vmatprep.subr.mxu0 0.0
    %118 = vmatpush1.msra.mxu0 0.0
    %119 = vmatprep.subr.mxu0 0.0
    %120 = vmatpush1.msra.mxu0 %v85
    %121 = vmatprep.subr.mxu0 0.0
    %122 = vmatpush1.msra.mxu0 %v84
    %123 = vmatprep.subr.mxu0 0.0
    %124 = vmatpush1.msra.mxu0 %v83
    %125 = vmatprep.subr.mxu0 0.0
    %126 = vmatpush1.msra.mxu0 %v82
    %127 = vmatprep.subr.mxu0 0.0
    %128 = vmatpush2.msra.mxu0 0.0
    %129 = vmatprep.subr.mxu0 0.0
    %130 = vmatpush2.msra.mxu0 0.0
    %131 = vmatprep.subr.mxu0 0.0
    %132 = vmatpush2.msra.mxu0 0.0
    %133 = vmatprep.subr.mxu0 0.0
    %134 = vmatpush2.msra.mxu0 0.0
    %135 = vmatprep.subr.mxu0 0.0
    %136 = vmatpush2.msra.mxu0 0.0
    %137 = vmatprep.subr.mxu0 0.0
    %138 = vmatpush2.msra.mxu0 0.0
    %139 = vmatprep.subr.mxu0 0.0
    %140 = vmatpush2.msra.mxu0 0.0
    %141 = vmatprep.subr.mxu0 0.0
    %142 = vmatpush2.msra.mxu0 0.0
    %143 = vmatprep.subr.mxu0 0.0
    %144 = vmatpush2.msra.mxu0 0.0
    %145 = vmatprep.subr.mxu0 0.0
    %146 = vmatpush2.msra.mxu0 0.0
    %147 = vmatprep.subr.mxu0 0.0
    %148 = vmatpush2.msra.mxu0 0.0
    %149 = vmatprep.subr.mxu0 0.0
    %150 = vmatpush2.msra.mxu0 0.0
    %151 = vmatprep.subr.mxu0 0.0
    %152 = vmatpush2.msra.mxu0 0.0
    %153 = vmatprep.subr.mxu0 0.0
    %154 = vmatpush2.msra.mxu0 0.0
    %155 = vmatprep.subr.mxu0 0.0
    %156 = vmatpush2.msra.mxu0 0.0
    %157 = vmatprep.subr.mxu0 0.0
    %158 = vmatpush2.msra.mxu0 0.0
    %159 = vmatprep.mubr.f32.mxu0 0.0
    %160 = vmatmul.mubr.f32.gmra.mxu0 %v87
    %v161 = vpop.f32.mrf.mxu0
    %v162 = vadd.f32 0.0, %v161
    %v163 = vpop.f32.mrf.mxu0
    %164 = vmatprep.mubr.f32.mxu0 0.0
    %165 = vmatmul.mubr.f32.gmra.mxu0 %v90
    %v166 = vpop.f32.mrf.mxu0
    %v167 = vadd.f32 0.0, %v166
    %v168 = vpop.f32.mrf.mxu0
    %169 = vmatprep.mubr.f32.mxu0 0.0
    %170 = vmatmul.mubr.f32.gmra.mxu0 %v93
    %v171 = vpop.f32.mrf.mxu0
    %v172 = vadd.f32 0.0, %v171
    %v173 = vpop.f32.mrf.mxu0
    %174 = vdwg.mxu0
    %v175 = vld [vmem:[%s0] sm:$0xff]
    %v176 = vld [vmem:[%s0 + $0x8] sm:$0xff]
    %v177 = vld [vmem:[%s0 + $0x10] sm:$0xff]
    %v178 = vld [vmem:[%s1] sm:$0x1]
    %179 = vset.pattern.permute.xlu0 0
    %180 = vperm.xlu0 %179, %v175
    %v181 = vpop.permute.xlu0 %180
    %182 = vset.pattern.permute.xlu0 0
    %183 = vperm.xlu0 %182, %v176
    %v184 = vpop.permute.xlu0 %183
    %185 = vset.pattern.permute.xlu0 0
    %186 = vperm.xlu0 %185, %v177
    %v187 = vpop.permute.xlu0 %186
    %v188 = vlaneseq
    %v189 = vshrl.u32 %v188, 7
    %v190 = vsub.s32 0, %v189
    %v191 = vrot.slane %v178, %v190
    %vm192 = vcmp.eq.s32.totalorder %v181, %v191
    %vm193 = vcmp.eq.s32.totalorder %v184, %v191
    %vm194 = vcmp.eq.s32.totalorder %v187, %v191
    %v195 = vmax.f32 %v162, 0.0
    %v196 = vmax.f32 %v167, 0.0
    %v197 = vmax.f32 %v172, 0.0
    %v198 = vsel %vm192, %v195, 0.0
    %v199 = vsel %vm193, %v196, 0.0
    %v200 = vsel %vm194, %v197, 0.0
    %201 = vadd.xlane.f32.xlu0 %v198
    %v202 = vpop.xlane.xlu0 %201
    %203 = vadd.xlane.f32.xlu0 %v199
    %v204 = vpop.xlane.xlu0 %203
    %205 = vadd.xlane.f32.xlu0 %v200
    %v206 = vpop.xlane.xlu0 %205
    %v207 = vld [vmem:[%s2] sm:$0xff]
    %v208 = vld [vmem:[%s2 + $0x8] sm:$0xff]
    %v209 = vld [vmem:[%s2 + $0x10] sm:$0xff]
    %v210 = vmul.f32 %v207, 1e-06
    %v211 = vmul.f32 %v208, 1e-06
    %v212 = vmul.f32 %v209, 1e-06
    %v213 = vadd.f32 %v202, %v210
    %v214 = vadd.f32 %v204, %v211
    %v215 = vadd.f32 %v206, %v212
    %v216 = vmax.f32 %v213, 1e-30
    %v217 = vmax.f32 %v214, 1e-30
    %v218 = vmax.f32 %v215, 1e-30
    %v219 = vrcp.pop %v216
    %v220 = vrcp.pop %v217
    %v221 = vrcp.pop %v218
    %v222 = vld [vmem:[%s6] sm:$0xff]
    %v223 = vld [vmem:[%s6 + $0x8] sm:$0xff]
    %v224 = vld [vmem:[%s6 + $0x10] sm:$0xff]
    %v225 = vld [vmem:[%s6 + $0x18] sm:$0xff]
    %v226 = vld [vmem:[%s6 + $0x20] sm:$0xff]
    %v227 = vld [vmem:[%s6 + $0x28] sm:$0xff]
    %v228 = vld [vmem:[%s6 + $0x30] sm:$0xff]
    %v229 = vld [vmem:[%s6 + $0x38] sm:$0xff]
    %v230 = vld [vmem:[%s6 + $0x40] sm:$0xff]
    %v231 = vld [vmem:[%s6 + $0x48] sm:$0xff]
    %v232 = vld [vmem:[%s6 + $0x50] sm:$0xff]
    %v233 = vld [vmem:[%s6 + $0x58] sm:$0xff]
    %v234 = vld [vmem:[%s6 + $0x60] sm:$0xff]
    %v235 = vld [vmem:[%s6 + $0x68] sm:$0xff]
    %v236 = vld [vmem:[%s6 + $0x70] sm:$0xff]
    %v237 = vld [vmem:[%s6 + $0x78] sm:$0xff]
    %238 = vmatprep.subr.mxu0 0.0
    %239 = vmatpush1.msra.mxu0 %v237
    %240 = vmatprep.subr.mxu0 0.0
    %241 = vmatpush1.msra.mxu0 %v236
    %242 = vmatprep.subr.mxu0 0.0
    %243 = vmatpush1.msra.mxu0 %v235
    %244 = vmatprep.subr.mxu0 0.0
    %245 = vmatpush1.msra.mxu0 %v234
    %246 = vmatprep.subr.mxu0 0.0
    %247 = vmatpush1.msra.mxu0 %v233
    %248 = vmatprep.subr.mxu0 0.0
    %249 = vmatpush1.msra.mxu0 %v232
    %250 = vmatprep.subr.mxu0 0.0
    %251 = vmatpush1.msra.mxu0 %v231
    %252 = vmatprep.subr.mxu0 0.0
    %253 = vmatpush1.msra.mxu0 %v230
    %254 = vmatprep.subr.mxu0 0.0
    %255 = vmatpush1.msra.mxu0 %v229
    %256 = vmatprep.subr.mxu0 0.0
    %257 = vmatpush1.msra.mxu0 %v228
    %258 = vmatprep.subr.mxu0 0.0
    %259 = vmatpush1.msra.mxu0 %v227
    %260 = vmatprep.subr.mxu0 0.0
    %261 = vmatpush1.msra.mxu0 %v226
    %262 = vmatprep.subr.mxu0 0.0
    %263 = vmatpush1.msra.mxu0 %v225
    %264 = vmatprep.subr.mxu0 0.0
    %265 = vmatpush1.msra.mxu0 %v224
    %266 = vmatprep.subr.mxu0 0.0
    %267 = vmatpush1.msra.mxu0 %v223
    %268 = vmatprep.subr.mxu0 0.0
    %269 = vmatpush1.msra.mxu0 %v222
    %270 = vmatprep.subr.mxu0 0.0
    %271 = vmatpush2.msra.mxu0 0.0
    %272 = vmatprep.subr.mxu0 0.0
    %273 = vmatpush2.msra.mxu0 0.0
    %274 = vmatprep.subr.mxu0 0.0
    %275 = vmatpush2.msra.mxu0 0.0
    %276 = vmatprep.subr.mxu0 0.0
    %277 = vmatpush2.msra.mxu0 0.0
    %278 = vmatprep.subr.mxu0 0.0
    %279 = vmatpush2.msra.mxu0 0.0
    %280 = vmatprep.subr.mxu0 0.0
    %281 = vmatpush2.msra.mxu0 0.0
    %282 = vmatprep.subr.mxu0 0.0
    %283 = vmatpush2.msra.mxu0 0.0
    %284 = vmatprep.subr.mxu0 0.0
    %285 = vmatpush2.msra.mxu0 0.0
    %286 = vmatprep.subr.mxu0 0.0
    %287 = vmatpush2.msra.mxu0 0.0
    %288 = vmatprep.subr.mxu0 0.0
    %289 = vmatpush2.msra.mxu0 0.0
    %290 = vmatprep.subr.mxu0 0.0
    %291 = vmatpush2.msra.mxu0 0.0
    %292 = vmatprep.subr.mxu0 0.0
    %293 = vmatpush2.msra.mxu0 0.0
    %294 = vmatprep.subr.mxu0 0.0
    %295 = vmatpush2.msra.mxu0 0.0
    %296 = vmatprep.subr.mxu0 0.0
    %297 = vmatpush2.msra.mxu0 0.0
    %298 = vmatprep.subr.mxu0 0.0
    %299 = vmatpush2.msra.mxu0 0.0
    %300 = vmatprep.subr.mxu0 0.0
    %301 = vmatpush2.msra.mxu0 0.0
    %302 = vmatprep.mubr.f32.mxu0 0.0
    %303 = vmatmul.mubr.f32.gmra.mxu0 %v198
    %v304 = vpop.f32.mrf.mxu0
    %v305 = vadd.f32 0.0, %v304
    %v306 = vpop.f32.mrf.mxu0
    %307 = vmatprep.mubr.f32.mxu0 0.0
    %308 = vmatmul.mubr.f32.gmra.mxu0 %v199
    %v309 = vpop.f32.mrf.mxu0
    %v310 = vadd.f32 0.0, %v309
    %v311 = vpop.f32.mrf.mxu0
    %312 = vmatprep.mubr.f32.mxu0 0.0
    %313 = vmatmul.mubr.f32.gmra.mxu0 %v200
    %v314 = vpop.f32.mrf.mxu0
    %v315 = vadd.f32 0.0, %v314
    %v316 = vpop.f32.mrf.mxu0
    %317 = vdwg.mxu0
    %319 = vset.pattern.permute.xlu0 0
    %320 = vperm.xlu0 %319, %v219
    %v321 = vpop.permute.xlu0 %320
    %324 = vset.pattern.permute.xlu0 0
    %325 = vperm.xlu0 %324, %v220
    %v326 = vpop.permute.xlu0 %325
    %329 = vset.pattern.permute.xlu0 0
    %330 = vperm.xlu0 %329, %v221
    %v331 = vpop.permute.xlu0 %330
    %v333 = vmul.f32 %v305, %v321
    %v334 = vmul.f32 %v310, %v326
    %v335 = vmul.f32 %v315, %v331
    %v336 = vmul.f32 %v57, %v333
    %v337 = vmul.f32 %v58, %v334
    %v338 = vmul.f32 %v59, %v335
    %v339 = vmul.f32 %v333, %v333
    %v340 = vmul.f32 %v334, %v334
    %v341 = vmul.f32 %v335, %v335
    %v342 = vld [vmem:[%s8] sm:$0xff]
    %v343 = vld [vmem:[%s8 + $0x8] sm:$0xff]
    %v344 = vld [vmem:[%s8 + $0x10] sm:$0xff]
    %v345 = vld [vmem:[%s8 + $0x18] sm:$0xff]
    %v347 = vsel %vm63, %v336, 0
    %v350 = vsel %vm63, %v337, 0
    %v353 = vsel %vm63, %v338, 0
    %v356 = vsel %vm63, %v60, 0
    %v359 = vsel %vm63, %v61, 0
    %v362 = vsel %vm63, %v62, 0
    %v365 = vsel %vm63, %v339, 0
    %v368 = vsel %vm63, %v340, 0
    %v371 = vsel %vm63, %v341, 0
    %373 = vmatprep.subr.mxu0 0.0
    %374 = vmatpush1.msra.mxu0 0.0
    %375 = vmatprep.subr.mxu0 0.0
    %376 = vmatpush1.msra.mxu0 0.0
    %377 = vmatprep.subr.mxu0 0.0
    %378 = vmatpush1.msra.mxu0 0.0
    %379 = vmatprep.subr.mxu0 0.0
    %380 = vmatpush1.msra.mxu0 0.0
    %381 = vmatprep.subr.mxu0 0.0
    %382 = vmatpush1.msra.mxu0 0.0
    %383 = vmatprep.subr.mxu0 0.0
    %384 = vmatpush1.msra.mxu0 0.0
    %385 = vmatprep.subr.mxu0 0.0
    %386 = vmatpush1.msra.mxu0 0.0
    %387 = vmatprep.subr.mxu0 0.0
    %388 = vmatpush1.msra.mxu0 0.0
    %389 = vmatprep.subr.mxu0 0.0
    %390 = vmatpush1.msra.mxu0 0.0
    %391 = vmatprep.subr.mxu0 0.0
    %392 = vmatpush1.msra.mxu0 0.0
    %393 = vmatprep.subr.mxu0 0.0
    %394 = vmatpush1.msra.mxu0 0.0
    %395 = vmatprep.subr.mxu0 0.0
    %396 = vmatpush1.msra.mxu0 0.0
    %397 = vmatprep.subr.mxu0 0.0
    %398 = vmatpush1.msra.mxu0 %v345
    %399 = vmatprep.subr.mxu0 0.0
    %400 = vmatpush1.msra.mxu0 %v344
    %401 = vmatprep.subr.mxu0 0.0
    %402 = vmatpush1.msra.mxu0 %v343
    %403 = vmatprep.subr.mxu0 0.0
    %404 = vmatpush1.msra.mxu0 %v342
    %405 = vmatprep.subr.mxu0 0.0
    %406 = vmatpush2.msra.mxu0 0.0
    %407 = vmatprep.subr.mxu0 0.0
    %408 = vmatpush2.msra.mxu0 0.0
    %409 = vmatprep.subr.mxu0 0.0
    %410 = vmatpush2.msra.mxu0 0.0
    %411 = vmatprep.subr.mxu0 0.0
    %412 = vmatpush2.msra.mxu0 0.0
    %413 = vmatprep.subr.mxu0 0.0
    %414 = vmatpush2.msra.mxu0 0.0
    %415 = vmatprep.subr.mxu0 0.0
    %416 = vmatpush2.msra.mxu0 0.0
    %417 = vmatprep.subr.mxu0 0.0
    %418 = vmatpush2.msra.mxu0 0.0
    %419 = vmatprep.subr.mxu0 0.0
    %420 = vmatpush2.msra.mxu0 0.0
    %421 = vmatprep.subr.mxu0 0.0
    %422 = vmatpush2.msra.mxu0 0.0
    %423 = vmatprep.subr.mxu0 0.0
    %424 = vmatpush2.msra.mxu0 0.0
    %425 = vmatprep.subr.mxu0 0.0
    %426 = vmatpush2.msra.mxu0 0.0
    %427 = vmatprep.subr.mxu0 0.0
    %428 = vmatpush2.msra.mxu0 0.0
    %429 = vmatprep.subr.mxu0 0.0
    %430 = vmatpush2.msra.mxu0 0.0
    %431 = vmatprep.subr.mxu0 0.0
    %432 = vmatpush2.msra.mxu0 0.0
    %433 = vmatprep.subr.mxu0 0.0
    %434 = vmatpush2.msra.mxu0 0.0
    %435 = vmatprep.subr.mxu0 0.0
    %436 = vmatpush2.msra.mxu0 0.0
    %437 = vmatprep.mubr.f32.mxu0 0.0
    %438 = vmatmul.mubr.f32.gmra.mxu0 %v347
    %v439 = vpop.f32.mrf.mxu0
    %v440 = vadd.f32 0.0, %v439
    %v441 = vpop.f32.mrf.mxu0
    %442 = vmatprep.mubr.f32.mxu0 0.0
    %443 = vmatmul.mubr.f32.gmra.mxu0 %v350
    %v444 = vpop.f32.mrf.mxu0
    %v445 = vadd.f32 0.0, %v444
    %v446 = vpop.f32.mrf.mxu0
    %447 = vmatprep.mubr.f32.mxu0 0.0
    %448 = vmatmul.mubr.f32.gmra.mxu0 %v353
    %v449 = vpop.f32.mrf.mxu0
    %v450 = vadd.f32 0.0, %v449
    %v451 = vpop.f32.mrf.mxu0
    %452 = vmatprep.mubr.f32.mxu0 0.0
    %453 = vmatmul.mubr.f32.gmra.mxu0 %v356
    %v454 = vpop.f32.mrf.mxu0
    %v455 = vadd.f32 0.0, %v454
    %v456 = vpop.f32.mrf.mxu0
    %457 = vmatprep.mubr.f32.mxu0 0.0
    %458 = vmatmul.mubr.f32.gmra.mxu0 %v359
    %v459 = vpop.f32.mrf.mxu0
    %v460 = vadd.f32 0.0, %v459
    %v461 = vpop.f32.mrf.mxu0
    %462 = vmatprep.mubr.f32.mxu0 0.0
    %463 = vmatmul.mubr.f32.gmra.mxu0 %v362
    %v464 = vpop.f32.mrf.mxu0
    %v465 = vadd.f32 0.0, %v464
    %v466 = vpop.f32.mrf.mxu0
    %467 = vmatprep.mubr.f32.mxu0 0.0
    %468 = vmatmul.mubr.f32.gmra.mxu0 %v365
    %v469 = vpop.f32.mrf.mxu0
    %v470 = vadd.f32 0.0, %v469
    %v471 = vpop.f32.mrf.mxu0
    %472 = vmatprep.mubr.f32.mxu0 0.0
    %473 = vmatmul.mubr.f32.gmra.mxu0 %v368
    %v474 = vpop.f32.mrf.mxu0
    %v475 = vadd.f32 0.0, %v474
    %v476 = vpop.f32.mrf.mxu0
    %477 = vmatprep.mubr.f32.mxu0 0.0
    %478 = vmatmul.mubr.f32.gmra.mxu0 %v371
    %v479 = vpop.f32.mrf.mxu0
    %v480 = vadd.f32 0.0, %v479
    %v481 = vpop.f32.mrf.mxu0
    %482 = vdwg.mxu0
    %v483 = vadd.f32 %v455, 1e-06
    %v484 = vadd.f32 %v460, 1e-06
    %v485 = vadd.f32 %v465, 1e-06
    %v486 = vadd.f32 %v470, 1e-06
    %v487 = vadd.f32 %v475, 1e-06
    %v488 = vadd.f32 %v480, 1e-06
    %v489 = vmul.f32 %v483, %v486
    %v490 = vmul.f32 %v484, %v487
    %v491 = vmul.f32 %v485, %v488
    %v492 = vrsqrt.pop %v489
    %v493 = vrsqrt.pop %v490
    %v494 = vrsqrt.pop %v491
    %v495 = vmul.f32 %v440, %v492
    %v496 = vmul.f32 %v445, %v493
    %v497 = vmul.f32 %v450, %v494
    %498 = vst [vmem:[#allocation3] sm:$0xff] %v495
    %499 = vst [vmem:[#allocation3 + $0x8] sm:$0xff] %v496
    %500 = vst [vmem:[#allocation3 + $0x10] sm:$0xff] %v497
    %v501 = vsel %vm63, %v57, 1.0
    %v502 = vsel %vm63, %v58, 1.0
    %v503 = vsel %vm63, %v59, 1.0
    %v504 = vld [vmem:[#allocation2] sm:$0xff]
    %v505 = vld [vmem:[#allocation2 + $0x8] sm:$0xff]
    %v506 = vld [vmem:[#allocation2 + $0x10] sm:$0xff]
    %v507 = vld [vmem:[#allocation2 + $0x18] sm:$0xff]
    %v508 = vld [vmem:[#allocation2 + $0x20] sm:$0xff]
    %v509 = vld [vmem:[#allocation2 + $0x28] sm:$0xff]
    %v510 = vld [vmem:[#allocation2 + $0x30] sm:$0xff]
    %v511 = vld [vmem:[#allocation2 + $0x38] sm:$0xff]
    %v512 = vld [vmem:[#allocation2 + $0x40] sm:$0xff]
    %v513 = vld [vmem:[#allocation2 + $0x48] sm:$0xff]
    %v514 = vld [vmem:[#allocation2 + $0x50] sm:$0xff]
    %v515 = vld [vmem:[#allocation2 + $0x58] sm:$0xff]
    %v516 = vld [vmem:[#allocation2 + $0x60] sm:$0xff]
    %v517 = vld [vmem:[#allocation2 + $0x68] sm:$0xff]
    %v518 = vld [vmem:[#allocation2 + $0x70] sm:$0xff]
    %v519 = vld [vmem:[#allocation2 + $0x78] sm:$0xff]
    %520 = vxpose.xlu0.b32.start [1/16] %v198, 128
    %521 = vxpose.xlu0.b32.cont [2/16] %v199, 128
    %522 = vxpose.xlu0.b32.cont [3/16] %v200, 128
    %523 = vxpose.xlu0.b32.cont [4/16] 0.0, 128
    %524 = vxpose.xlu0.b32.cont [5/16] 0.0, 128
    %525 = vxpose.xlu0.b32.cont [6/16] 0.0, 128
    %526 = vxpose.xlu0.b32.cont [7/16] 0.0, 128
    %527 = vxpose.xlu0.b32.cont [8/16] 0.0, 128
    %528 = vxpose.xlu0.b32.cont [9/16] 0.0, 128
    %529 = vxpose.xlu0.b32.cont [10/16] 0.0, 128
    %530 = vxpose.xlu0.b32.cont [11/16] 0.0, 128
    %531 = vxpose.xlu0.b32.cont [12/16] 0.0, 128
    %532 = vxpose.xlu0.b32.cont [13/16] 0.0, 128
    %533 = vxpose.xlu0.b32.cont [14/16] 0.0, 128
    %534 = vxpose.xlu0.b32.cont [15/16] 0.0, 128
    %535 = vxpose.xlu0.b32.end [16/16] 0.0, 128
    %v536 = vpop.trf.xlu0
    %v537 = vpop.trf.xlu0
    %v538 = vpop.trf.xlu0
    %v539 = vpop.trf.xlu0
    %v540 = vpop.trf.xlu0
    %v541 = vpop.trf.xlu0
    %v542 = vpop.trf.xlu0
    %v543 = vpop.trf.xlu0
    %v544 = vpop.trf.xlu0
    %v545 = vpop.trf.xlu0
    %v546 = vpop.trf.xlu0
    %v547 = vpop.trf.xlu0
    %v548 = vpop.trf.xlu0
    %v549 = vpop.trf.xlu0
    %v550 = vpop.trf.xlu0
    %v551 = vpop.trf.xlu0
    %vm552 = vcmask 195584
    %v554 = vsel %vm552, %v536, 0
    %v557 = vsel %vm552, %v537, 0
    %v560 = vsel %vm552, %v538, 0
    %v563 = vsel %vm552, %v539, 0
    %v566 = vsel %vm552, %v540, 0
    %v569 = vsel %vm552, %v541, 0
    %v572 = vsel %vm552, %v542, 0
    %v575 = vsel %vm552, %v543, 0
    %v578 = vsel %vm552, %v544, 0
    %v581 = vsel %vm552, %v545, 0
    %v584 = vsel %vm552, %v546, 0
    %v587 = vsel %vm552, %v547, 0
    %v590 = vsel %vm552, %v548, 0
    %v593 = vsel %vm552, %v549, 0
    %v596 = vsel %vm552, %v550, 0
    %v599 = vsel %vm552, %v551, 0
    %601 = vmatprep.subr.mxu0 0.0
    %602 = vmatpush1.msra.mxu0 0.0
    %603 = vmatprep.subr.mxu0 0.0
    %604 = vmatpush1.msra.mxu0 0.0
    %605 = vmatprep.subr.mxu0 0.0
    %606 = vmatpush1.msra.mxu0 0.0
    %607 = vmatprep.subr.mxu0 0.0
    %608 = vmatpush1.msra.mxu0 0.0
    %609 = vmatprep.subr.mxu0 0.0
    %610 = vmatpush1.msra.mxu0 0.0
    %611 = vmatprep.subr.mxu0 0.0
    %612 = vmatpush1.msra.mxu0 0.0
    %613 = vmatprep.subr.mxu0 0.0
    %614 = vmatpush1.msra.mxu0 0.0
    %615 = vmatprep.subr.mxu0 0.0
    %616 = vmatpush1.msra.mxu0 0.0
    %617 = vmatprep.subr.mxu0 0.0
    %618 = vmatpush1.msra.mxu0 0.0
    %619 = vmatprep.subr.mxu0 0.0
    %620 = vmatpush1.msra.mxu0 0.0
    %621 = vmatprep.subr.mxu0 0.0
    %622 = vmatpush1.msra.mxu0 0.0
    %623 = vmatprep.subr.mxu0 0.0
    %624 = vmatpush1.msra.mxu0 0.0
    %625 = vmatprep.subr.mxu0 0.0
    %626 = vmatpush1.msra.mxu0 0.0
    %627 = vmatprep.subr.mxu0 0.0
    %628 = vmatpush1.msra.mxu0 %v503
    %629 = vmatprep.subr.mxu0 0.0
    %630 = vmatpush1.msra.mxu0 %v502
    %631 = vmatprep.subr.mxu0 0.0
    %632 = vmatpush1.msra.mxu0 %v501
    %633 = vmatprep.subr.mxu0 0.0
    %634 = vmatpush2.msra.mxu0 0.0
    %635 = vmatprep.subr.mxu0 0.0
    %636 = vmatpush2.msra.mxu0 0.0
    %637 = vmatprep.subr.mxu0 0.0
    %638 = vmatpush2.msra.mxu0 0.0
    %639 = vmatprep.subr.mxu0 0.0
    %640 = vmatpush2.msra.mxu0 0.0
    %641 = vmatprep.subr.mxu0 0.0
    %642 = vmatpush2.msra.mxu0 0.0
    %643 = vmatprep.subr.mxu0 0.0
    %644 = vmatpush2.msra.mxu0 0.0
    %645 = vmatprep.subr.mxu0 0.0
    %646 = vmatpush2.msra.mxu0 0.0
    %647 = vmatprep.subr.mxu0 0.0
    %648 = vmatpush2.msra.mxu0 0.0
    %649 = vmatprep.subr.mxu0 0.0
    %650 = vmatpush2.msra.mxu0 0.0
    %651 = vmatprep.subr.mxu0 0.0
    %652 = vmatpush2.msra.mxu0 0.0
    %653 = vmatprep.subr.mxu0 0.0
    %654 = vmatpush2.msra.mxu0 0.0
    %655 = vmatprep.subr.mxu0 0.0
    %656 = vmatpush2.msra.mxu0 0.0
    %657 = vmatprep.subr.mxu0 0.0
    %658 = vmatpush2.msra.mxu0 0.0
    %659 = vmatprep.subr.mxu0 0.0
    %660 = vmatpush2.msra.mxu0 0.0
    %661 = vmatprep.subr.mxu0 0.0
    %662 = vmatpush2.msra.mxu0 0.0
    %663 = vmatprep.subr.mxu0 0.0
    %664 = vmatpush2.msra.mxu0 0.0
    %665 = vmatprep.mubr.f32.mxu0 0.0
    %666 = vmatmul.mubr.f32.gmra.mxu0 %v554
    %v667 = vpop.f32.mrf.mxu0
    %v668 = vadd.f32 0.0, %v667
    %v669 = vpop.f32.mrf.mxu0
    %670 = vmatprep.mubr.f32.mxu0 0.0
    %671 = vmatmul.mubr.f32.gmra.mxu0 %v557
    %v672 = vpop.f32.mrf.mxu0
    %v673 = vadd.f32 0.0, %v672
    %v674 = vpop.f32.mrf.mxu0
    %675 = vmatprep.mubr.f32.mxu0 0.0
    %676 = vmatmul.mubr.f32.gmra.mxu0 %v560
    %v677 = vpop.f32.mrf.mxu0
    %v678 = vadd.f32 0.0, %v677
    %v679 = vpop.f32.mrf.mxu0
    %680 = vmatprep.mubr.f32.mxu0 0.0
    %681 = vmatmul.mubr.f32.gmra.mxu0 %v563
    %v682 = vpop.f32.mrf.mxu0
    %v683 = vadd.f32 0.0, %v682
    %v684 = vpop.f32.mrf.mxu0
    %685 = vmatprep.mubr.f32.mxu0 0.0
    %686 = vmatmul.mubr.f32.gmra.mxu0 %v566
    %v687 = vpop.f32.mrf.mxu0
    %v688 = vadd.f32 0.0, %v687
    %v689 = vpop.f32.mrf.mxu0
    %690 = vmatprep.mubr.f32.mxu0 0.0
    %691 = vmatmul.mubr.f32.gmra.mxu0 %v569
    %v692 = vpop.f32.mrf.mxu0
    %v693 = vadd.f32 0.0, %v692
    %v694 = vpop.f32.mrf.mxu0
    %695 = vmatprep.mubr.f32.mxu0 0.0
    %696 = vmatmul.mubr.f32.gmra.mxu0 %v572
    %v697 = vpop.f32.mrf.mxu0
    %v698 = vadd.f32 0.0, %v697
    %v699 = vpop.f32.mrf.mxu0
    %700 = vmatprep.mubr.f32.mxu0 0.0
    %701 = vmatmul.mubr.f32.gmra.mxu0 %v575
    %v702 = vpop.f32.mrf.mxu0
    %v703 = vadd.f32 0.0, %v702
    %v704 = vpop.f32.mrf.mxu0
    %705 = vmatprep.mubr.f32.mxu0 0.0
    %706 = vmatmul.mubr.f32.gmra.mxu0 %v578
    %v707 = vpop.f32.mrf.mxu0
    %v708 = vadd.f32 0.0, %v707
    %v709 = vpop.f32.mrf.mxu0
    %710 = vmatprep.mubr.f32.mxu0 0.0
    %711 = vmatmul.mubr.f32.gmra.mxu0 %v581
    %v712 = vpop.f32.mrf.mxu0
    %v713 = vadd.f32 0.0, %v712
    %v714 = vpop.f32.mrf.mxu0
    %715 = vmatprep.mubr.f32.mxu0 0.0
    %716 = vmatmul.mubr.f32.gmra.mxu0 %v584
    %v717 = vpop.f32.mrf.mxu0
    %v718 = vadd.f32 0.0, %v717
    %v719 = vpop.f32.mrf.mxu0
    %720 = vmatprep.mubr.f32.mxu0 0.0
    %721 = vmatmul.mubr.f32.gmra.mxu0 %v587
    %v722 = vpop.f32.mrf.mxu0
    %v723 = vadd.f32 0.0, %v722
    %v724 = vpop.f32.mrf.mxu0
    %725 = vmatprep.mubr.f32.mxu0 0.0
    %726 = vmatmul.mubr.f32.gmra.mxu0 %v590
    %v727 = vpop.f32.mrf.mxu0
    %v728 = vadd.f32 0.0, %v727
    %v729 = vpop.f32.mrf.mxu0
    %730 = vmatprep.mubr.f32.mxu0 0.0
    %731 = vmatmul.mubr.f32.gmra.mxu0 %v593
    %v732 = vpop.f32.mrf.mxu0
    %v733 = vadd.f32 0.0, %v732
    %v734 = vpop.f32.mrf.mxu0
    %735 = vmatprep.mubr.f32.mxu0 0.0
    %736 = vmatmul.mubr.f32.gmra.mxu0 %v596
    %v737 = vpop.f32.mrf.mxu0
    %v738 = vadd.f32 0.0, %v737
    %v739 = vpop.f32.mrf.mxu0
    %740 = vmatprep.mubr.f32.mxu0 0.0
    %741 = vmatmul.mubr.f32.gmra.mxu0 %v599
    %v742 = vpop.f32.mrf.mxu0
    %v743 = vadd.f32 0.0, %v742
    %v744 = vpop.f32.mrf.mxu0
    %745 = vdwg.mxu0
    %v746 = vadd.f32 %v504, %v668
    %v747 = vadd.f32 %v505, %v673
    %v748 = vadd.f32 %v506, %v678
    %v749 = vadd.f32 %v507, %v683
    %v750 = vadd.f32 %v508, %v688
    %v751 = vadd.f32 %v509, %v693
    %v752 = vadd.f32 %v510, %v698
    %v753 = vadd.f32 %v511, %v703
    %v754 = vadd.f32 %v512, %v708
    %v755 = vadd.f32 %v513, %v713
    %v756 = vadd.f32 %v514, %v718
    %v757 = vadd.f32 %v515, %v723
    %v758 = vadd.f32 %v516, %v728
    %v759 = vadd.f32 %v517, %v733
    %v760 = vadd.f32 %v518, %v738
    %v761 = vadd.f32 %v519, %v743
    %vm762 = vcmask 269312
    %763 = vst.msk [vmem:[#allocation2] sm:$0xff] %vm762, %v746
    %764 = vst.msk [vmem:[#allocation2 + $0x8] sm:$0xff] %vm762, %v747
    %765 = vst.msk [vmem:[#allocation2 + $0x10] sm:$0xff] %vm762, %v748
    %766 = vst.msk [vmem:[#allocation2 + $0x18] sm:$0xff] %vm762, %v749
    %767 = vst.msk [vmem:[#allocation2 + $0x20] sm:$0xff] %vm762, %v750
    %768 = vst.msk [vmem:[#allocation2 + $0x28] sm:$0xff] %vm762, %v751
    %769 = vst.msk [vmem:[#allocation2 + $0x30] sm:$0xff] %vm762, %v752
    %770 = vst.msk [vmem:[#allocation2 + $0x38] sm:$0xff] %vm762, %v753
    %771 = vst.msk [vmem:[#allocation2 + $0x40] sm:$0xff] %vm762, %v754
    %772 = vst.msk [vmem:[#allocation2 + $0x48] sm:$0xff] %vm762, %v755
    %773 = vst.msk [vmem:[#allocation2 + $0x50] sm:$0xff] %vm762, %v756
    %774 = vst.msk [vmem:[#allocation2 + $0x58] sm:$0xff] %vm762, %v757
    %775 = vst.msk [vmem:[#allocation2 + $0x60] sm:$0xff] %vm762, %v758
    %776 = vst.msk [vmem:[#allocation2 + $0x68] sm:$0xff] %vm762, %v759
    %777 = vst.msk [vmem:[#allocation2 + $0x70] sm:$0xff] %vm762, %v760
    %778 = vst.msk [vmem:[#allocation2 + $0x78] sm:$0xff] %vm762, %v761
    // Predicated region
    $region42: #{tpu_custom_call.1} parent=1 // pred_check
      %p779 = pneg %p36
    $region43: #{tpu_custom_call.1} parent=1 // pred_check_branch
      %781 = sbr.rel (%p779) target = $region45
    $region44: #{tpu_custom_call.1} parent=1 // pred_region
      %v782 = vld [vmem:[%s7] sm:$0xff]
      %v783 = vld [vmem:[%s7 + $0x8] sm:$0xff]
      %v784 = vld [vmem:[%s7 + $0x10] sm:$0xff]
      %v785 = vld [vmem:[%s7 + $0x18] sm:$0xff]
      %v786 = vld [vmem:[%s7 + $0x20] sm:$0xff]
      %v787 = vld [vmem:[%s7 + $0x28] sm:$0xff]
      %v788 = vld [vmem:[%s7 + $0x30] sm:$0xff]
      %v789 = vld [vmem:[%s7 + $0x38] sm:$0xff]
      %v790 = vld [vmem:[%s7 + $0x40] sm:$0xff]
      %v791 = vld [vmem:[%s7 + $0x48] sm:$0xff]
      %v792 = vld [vmem:[%s7 + $0x50] sm:$0xff]
      %v793 = vld [vmem:[%s7 + $0x58] sm:$0xff]
      %v794 = vld [vmem:[%s7 + $0x60] sm:$0xff]
      %v795 = vld [vmem:[%s7 + $0x68] sm:$0xff]
      %v796 = vld [vmem:[%s7 + $0x70] sm:$0xff]
      %v797 = vld [vmem:[%s7 + $0x78] sm:$0xff]
      %v798 = vld [vmem:[#allocation2] sm:$0xff]
      %v799 = vld [vmem:[#allocation2 + $0x8] sm:$0xff]
      %v800 = vld [vmem:[#allocation2 + $0x10] sm:$0xff]
      %v801 = vld [vmem:[#allocation2 + $0x18] sm:$0xff]
      %v802 = vld [vmem:[#allocation2 + $0x20] sm:$0xff]
      %v803 = vld [vmem:[#allocation2 + $0x28] sm:$0xff]
      %v804 = vld [vmem:[#allocation2 + $0x30] sm:$0xff]
      %v805 = vld [vmem:[#allocation2 + $0x38] sm:$0xff]
      %v806 = vld [vmem:[#allocation2 + $0x40] sm:$0xff]
      %v807 = vld [vmem:[#allocation2 + $0x48] sm:$0xff]
      %v808 = vld [vmem:[#allocation2 + $0x50] sm:$0xff]
      %v809 = vld [vmem:[#allocation2 + $0x58] sm:$0xff]
      %v810 = vld [vmem:[#allocation2 + $0x60] sm:$0xff]
      %v811 = vld [vmem:[#allocation2 + $0x68] sm:$0xff]
      %v812 = vld [vmem:[#allocation2 + $0x70] sm:$0xff]
      %v813 = vld [vmem:[#allocation2 + $0x78] sm:$0xff]
      %v814 = vld [vmem:[%s3] sm:$0xff]
      %v815 = vld [vmem:[%s3 + $0x8] sm:$0xff]
      %v816 = vld [vmem:[%s3 + $0x10] sm:$0xff]
      %v817 = vld [vmem:[%s3 + $0x18] sm:$0xff]
      %v818 = vld [vmem:[%s3 + $0x20] sm:$0xff]
      %v819 = vld [vmem:[%s3 + $0x28] sm:$0xff]
      %v820 = vld [vmem:[%s3 + $0x30] sm:$0xff]
      %v821 = vld [vmem:[%s3 + $0x38] sm:$0xff]
      %v822 = vld [vmem:[%s3 + $0x40] sm:$0xff]
      %v823 = vld [vmem:[%s3 + $0x48] sm:$0xff]
      %v824 = vld [vmem:[%s3 + $0x50] sm:$0xff]
      %v825 = vld [vmem:[%s3 + $0x58] sm:$0xff]
      %v826 = vld [vmem:[%s3 + $0x60] sm:$0xff]
      %v827 = vld [vmem:[%s3 + $0x68] sm:$0xff]
      %v828 = vld [vmem:[%s3 + $0x70] sm:$0xff]
      %v829 = vld [vmem:[%s3 + $0x78] sm:$0xff]
      %v830 = vmul.f32 %v814, 1e-06
      %v831 = vmul.f32 %v815, 1e-06
      %v832 = vmul.f32 %v816, 1e-06
      %v833 = vmul.f32 %v817, 1e-06
      %v834 = vmul.f32 %v818, 1e-06
      %v835 = vmul.f32 %v819, 1e-06
      %v836 = vmul.f32 %v820, 1e-06
      %v837 = vmul.f32 %v821, 1e-06
      %v838 = vmul.f32 %v822, 1e-06
      %v839 = vmul.f32 %v823, 1e-06
      %v840 = vmul.f32 %v824, 1e-06
      %v841 = vmul.f32 %v825, 1e-06
      %v842 = vmul.f32 %v826, 1e-06
      %v843 = vmul.f32 %v827, 1e-06
      %v844 = vmul.f32 %v828, 1e-06
      %v845 = vmul.f32 %v829, 1e-06
      %862 = vrot.lane.b32.xlu0 %v830, 32
      %v863 = vpop.permute.xlu0 %862
      %864 = vrot.lane.b32.xlu0 %v831, 32
      %v865 = vpop.permute.xlu0 %864
      %866 = vrot.lane.b32.xlu0 %v832, 32
      %v867 = vpop.permute.xlu0 %866
      %868 = vrot.lane.b32.xlu0 %v833, 32
      %v869 = vpop.permute.xlu0 %868
      %870 = vrot.lane.b32.xlu0 %v834, 32
      %v871 = vpop.permute.xlu0 %870
      %872 = vrot.lane.b32.xlu0 %v835, 32
      %v873 = vpop.permute.xlu0 %872
      %874 = vrot.lane.b32.xlu0 %v836, 32
      %v875 = vpop.permute.xlu0 %874
      %876 = vrot.lane.b32.xlu0 %v837, 32
      %v877 = vpop.permute.xlu0 %876
      %878 = vrot.lane.b32.xlu0 %v838, 32
      %v879 = vpop.permute.xlu0 %878
      %880 = vrot.lane.b32.xlu0 %v839, 32
      %v881 = vpop.permute.xlu0 %880
      %882 = vrot.lane.b32.xlu0 %v840, 32
      %v883 = vpop.permute.xlu0 %882
      %884 = vrot.lane.b32.xlu0 %v841, 32
      %v885 = vpop.permute.xlu0 %884
      %886 = vrot.lane.b32.xlu0 %v842, 32
      %v887 = vpop.permute.xlu0 %886
      %888 = vrot.lane.b32.xlu0 %v843, 32
      %v889 = vpop.permute.xlu0 %888
      %890 = vrot.lane.b32.xlu0 %v844, 32
      %v891 = vpop.permute.xlu0 %890
      %892 = vrot.lane.b32.xlu0 %v845, 32
      %v893 = vpop.permute.xlu0 %892
      %v910 = vadd.f32 %v798, %v863
      %v911 = vadd.f32 %v799, %v865
      %v912 = vadd.f32 %v800, %v867
      %v913 = vadd.f32 %v801, %v869
      %v914 = vadd.f32 %v802, %v871
      %v915 = vadd.f32 %v803, %v873
      %v916 = vadd.f32 %v804, %v875
      %v917 = vadd.f32 %v805, %v877
      %v918 = vadd.f32 %v806, %v879
      %v919 = vadd.f32 %v807, %v881
      %v920 = vadd.f32 %v808, %v883
      %v921 = vadd.f32 %v809, %v885
      %v922 = vadd.f32 %v810, %v887
      %v923 = vadd.f32 %v811, %v889
      %v924 = vadd.f32 %v812, %v891
      %v925 = vadd.f32 %v813, %v893
      %v926 = vmax.f32 %v910, 1e-30
      %v927 = vmax.f32 %v911, 1e-30
      %v928 = vmax.f32 %v912, 1e-30
      %v929 = vmax.f32 %v913, 1e-30
      %v930 = vmax.f32 %v914, 1e-30
      %v931 = vmax.f32 %v915, 1e-30
      %v932 = vmax.f32 %v916, 1e-30
      %v933 = vmax.f32 %v917, 1e-30
      %v934 = vmax.f32 %v918, 1e-30
      %v935 = vmax.f32 %v919, 1e-30
      %v936 = vmax.f32 %v920, 1e-30
      %v937 = vmax.f32 %v921, 1e-30
      %v938 = vmax.f32 %v922, 1e-30
      %v939 = vmax.f32 %v923, 1e-30
      %v940 = vmax.f32 %v924, 1e-30
      %v941 = vmax.f32 %v925, 1e-30
      %v942 = vrcp.pop %v926
      %v943 = vrcp.pop %v927
      %v944 = vrcp.pop %v928
      %v945 = vrcp.pop %v929
      %v946 = vrcp.pop %v930
      %v947 = vrcp.pop %v931
      %v948 = vrcp.pop %v932
      %v949 = vrcp.pop %v933
      %v950 = vrcp.pop %v934
      %v951 = vrcp.pop %v935
      %v952 = vrcp.pop %v936
      %v953 = vrcp.pop %v937
      %v954 = vrcp.pop %v938
      %v955 = vrcp.pop %v939
      %v956 = vrcp.pop %v940
      %v957 = vrcp.pop %v941
      %959 = vset.pattern.permute.xlu0 32
      %960 = vperm.xlu0 %959, %v942
      %v961 = vpop.permute.xlu0 %960
      %964 = vset.pattern.permute.xlu0 32
      %965 = vperm.xlu0 %964, %v943
      %v966 = vpop.permute.xlu0 %965
      %969 = vset.pattern.permute.xlu0 32
      %970 = vperm.xlu0 %969, %v944
      %v971 = vpop.permute.xlu0 %970
      %974 = vset.pattern.permute.xlu0 32
      %975 = vperm.xlu0 %974, %v945
      %v976 = vpop.permute.xlu0 %975
      %979 = vset.pattern.permute.xlu0 32
      %980 = vperm.xlu0 %979, %v946
      %v981 = vpop.permute.xlu0 %980
      %984 = vset.pattern.permute.xlu0 32
      %985 = vperm.xlu0 %984, %v947
      %v986 = vpop.permute.xlu0 %985
      %989 = vset.pattern.permute.xlu0 32
      %990 = vperm.xlu0 %989, %v948
      %v991 = vpop.permute.xlu0 %990
      %994 = vset.pattern.permute.xlu0 32
      %995 = vperm.xlu0 %994, %v949
      %v996 = vpop.permute.xlu0 %995
      %999 = vset.pattern.permute.xlu0 32
      %1000 = vperm.xlu0 %999, %v950
      %v1001 = vpop.permute.xlu0 %1000
      %1004 = vset.pattern.permute.xlu0 32
      %1005 = vperm.xlu0 %1004, %v951
      %v1006 = vpop.permute.xlu0 %1005
      %1009 = vset.pattern.permute.xlu0 32
      %1010 = vperm.xlu0 %1009, %v952
      %v1011 = vpop.permute.xlu0 %1010
      %1014 = vset.pattern.permute.xlu0 32
      %1015 = vperm.xlu0 %1014, %v953
      %v1016 = vpop.permute.xlu0 %1015
      %1019 = vset.pattern.permute.xlu0 32
      %1020 = vperm.xlu0 %1019, %v954
      %v1021 = vpop.permute.xlu0 %1020
      %1024 = vset.pattern.permute.xlu0 32
      %1025 = vperm.xlu0 %1024, %v955
      %v1026 = vpop.permute.xlu0 %1025
      %1029 = vset.pattern.permute.xlu0 32
      %1030 = vperm.xlu0 %1029, %v956
      %v1031 = vpop.permute.xlu0 %1030
      %1034 = vset.pattern.permute.xlu0 32
      %1035 = vperm.xlu0 %1034, %v957
      %v1036 = vpop.permute.xlu0 %1035
      %v1038 = vmul.f32 %v798, %v961
      %v1039 = vmul.f32 %v799, %v966
      %v1040 = vmul.f32 %v800, %v971
      %v1041 = vmul.f32 %v801, %v976
      %v1042 = vmul.f32 %v802, %v981
      %v1043 = vmul.f32 %v803, %v986
      %v1044 = vmul.f32 %v804, %v991
      %v1045 = vmul.f32 %v805, %v996
      %v1046 = vmul.f32 %v806, %v1001
      %v1047 = vmul.f32 %v807, %v1006
      %v1048 = vmul.f32 %v808, %v1011
      %v1049 = vmul.f32 %v809, %v1016
      %v1050 = vmul.f32 %v810, %v1021
      %v1051 = vmul.f32 %v811, %v1026
      %v1052 = vmul.f32 %v812, %v1031
      %v1053 = vmul.f32 %v813, %v1036
      %v1054 = vmul.f32 %v782, %v1038
      %v1055 = vmul.f32 %v783, %v1039
      %v1056 = vmul.f32 %v784, %v1040
      %v1057 = vmul.f32 %v785, %v1041
      %v1058 = vmul.f32 %v786, %v1042
      %v1059 = vmul.f32 %v787, %v1043
      %v1060 = vmul.f32 %v788, %v1044
      %v1061 = vmul.f32 %v789, %v1045
      %v1062 = vmul.f32 %v790, %v1046
      %v1063 = vmul.f32 %v791, %v1047
      %v1064 = vmul.f32 %v792, %v1048
      %v1065 = vmul.f32 %v793, %v1049
      %v1066 = vmul.f32 %v794, %v1050
      %v1067 = vmul.f32 %v795, %v1051
      %v1068 = vmul.f32 %v796, %v1052
      %v1069 = vmul.f32 %v797, %v1053
      %v1070 = vmul.f32 %v782, %v782
      %v1071 = vmul.f32 %v783, %v783
      %v1072 = vmul.f32 %v784, %v784
      %v1073 = vmul.f32 %v785, %v785
      %v1074 = vmul.f32 %v786, %v786
      %v1075 = vmul.f32 %v787, %v787
      %v1076 = vmul.f32 %v788, %v788
      %v1077 = vmul.f32 %v789, %v789
      %v1078 = vmul.f32 %v790, %v790
      %v1079 = vmul.f32 %v791, %v791
      %v1080 = vmul.f32 %v792, %v792
      %v1081 = vmul.f32 %v793, %v793
      %v1082 = vmul.f32 %v794, %v794
      %v1083 = vmul.f32 %v795, %v795
      %v1084 = vmul.f32 %v796, %v796
      %v1085 = vmul.f32 %v797, %v797
      %v1086 = vmul.f32 %v1038, %v1038
      %v1087 = vmul.f32 %v1039, %v1039
      %v1088 = vmul.f32 %v1040, %v1040
      %v1089 = vmul.f32 %v1041, %v1041
      %v1090 = vmul.f32 %v1042, %v1042
      %v1091 = vmul.f32 %v1043, %v1043
      %v1092 = vmul.f32 %v1044, %v1044
      %v1093 = vmul.f32 %v1045, %v1045
      %v1094 = vmul.f32 %v1046, %v1046
      %v1095 = vmul.f32 %v1047, %v1047
      %v1096 = vmul.f32 %v1048, %v1048
      %v1097 = vmul.f32 %v1049, %v1049
      %v1098 = vmul.f32 %v1050, %v1050
      %v1099 = vmul.f32 %v1051, %v1051
      %v1100 = vmul.f32 %v1052, %v1052
      %v1101 = vmul.f32 %v1053, %v1053
      %v1102 = vld [vmem:[%s8] sm:$0xff]
      %v1103 = vld [vmem:[%s8 + $0x8] sm:$0xff]
      %v1104 = vld [vmem:[%s8 + $0x10] sm:$0xff]
      %v1105 = vld [vmem:[%s8 + $0x18] sm:$0xff]
      %v1107 = vsel %vm63, %v1054, 0
      %v1110 = vsel %vm63, %v1055, 0
      %v1113 = vsel %vm63, %v1056, 0
      %v1116 = vsel %vm63, %v1057, 0
      %v1119 = vsel %vm63, %v1058, 0
      %v1122 = vsel %vm63, %v1059, 0
      %v1125 = vsel %vm63, %v1060, 0
      %v1128 = vsel %vm63, %v1061, 0
      %v1131 = vsel %vm63, %v1062, 0
      %v1134 = vsel %vm63, %v1063, 0
      %v1137 = vsel %vm63, %v1064, 0
      %v1140 = vsel %vm63, %v1065, 0
      %v1143 = vsel %vm63, %v1066, 0
      %v1146 = vsel %vm63, %v1067, 0
      %v1149 = vsel %vm63, %v1068, 0
      %v1152 = vsel %vm63, %v1069, 0
      %v1155 = vsel %vm63, %v1070, 0
      %v1158 = vsel %vm63, %v1071, 0
      %v1161 = vsel %vm63, %v1072, 0
      %v1164 = vsel %vm63, %v1073, 0
      %v1167 = vsel %vm63, %v1074, 0
      %v1170 = vsel %vm63, %v1075, 0
      %v1173 = vsel %vm63, %v1076, 0
      %v1176 = vsel %vm63, %v1077, 0
      %v1179 = vsel %vm63, %v1078, 0
      %v1182 = vsel %vm63, %v1079, 0
      %v1185 = vsel %vm63, %v1080, 0
      %v1188 = vsel %vm63, %v1081, 0
      %v1191 = vsel %vm63, %v1082, 0
      %v1194 = vsel %vm63, %v1083, 0
      %v1197 = vsel %vm63, %v1084, 0
      %v1200 = vsel %vm63, %v1085, 0
      %v1203 = vsel %vm63, %v1086, 0
      %v1206 = vsel %vm63, %v1087, 0
      %v1209 = vsel %vm63, %v1088, 0
      %v1212 = vsel %vm63, %v1089, 0
      %v1215 = vsel %vm63, %v1090, 0
      %v1218 = vsel %vm63, %v1091, 0
      %v1221 = vsel %vm63, %v1092, 0
      %v1224 = vsel %vm63, %v1093, 0
      %v1227 = vsel %vm63, %v1094, 0
      %v1230 = vsel %vm63, %v1095, 0
      %v1233 = vsel %vm63, %v1096, 0
      %v1236 = vsel %vm63, %v1097, 0
      %v1239 = vsel %vm63, %v1098, 0
      %v1242 = vsel %vm63, %v1099, 0
      %v1245 = vsel %vm63, %v1100, 0
      %v1248 = vsel %vm63, %v1101, 0
      %1250 = vmatprep.subr.mxu0 0.0
      %1251 = vmatpush1.msra.mxu0 0.0
      %1252 = vmatprep.subr.mxu0 0.0
      %1253 = vmatpush1.msra.mxu0 0.0
      %1254 = vmatprep.subr.mxu0 0.0
      %1255 = vmatpush1.msra.mxu0 0.0
      %1256 = vmatprep.subr.mxu0 0.0
      %1257 = vmatpush1.msra.mxu0 0.0
      %1258 = vmatprep.subr.mxu0 0.0
      %1259 = vmatpush1.msra.mxu0 0.0
      %1260 = vmatprep.subr.mxu0 0.0
      %1261 = vmatpush1.msra.mxu0 0.0
      %1262 = vmatprep.subr.mxu0 0.0
      %1263 = vmatpush1.msra.mxu0 0.0
      %1264 = vmatprep.subr.mxu0 0.0
      %1265 = vmatpush1.msra.mxu0 0.0
      %1266 = vmatprep.subr.mxu0 0.0
      %1267 = vmatpush1.msra.mxu0 0.0
      %1268 = vmatprep.subr.mxu0 0.0
      %1269 = vmatpush1.msra.mxu0 0.0
      %1270 = vmatprep.subr.mxu0 0.0
      %1271 = vmatpush1.msra.mxu0 0.0
      %1272 = vmatprep.subr.mxu0 0.0
      %1273 = vmatpush1.msra.mxu0 0.0
      %1274 = vmatprep.subr.mxu0 0.0
      %1275 = vmatpush1.msra.mxu0 %v1105
      %1276 = vmatprep.subr.mxu0 0.0
      %1277 = vmatpush1.msra.mxu0 %v1104
      %1278 = vmatprep.subr.mxu0 0.0
      %1279 = vmatpush1.msra.mxu0 %v1103
      %1280 = vmatprep.subr.mxu0 0.0
      %1281 = vmatpush1.msra.mxu0 %v1102
      %1282 = vmatprep.subr.mxu0 0.0
      %1283 = vmatpush2.msra.mxu0 0.0
      %1284 = vmatprep.subr.mxu0 0.0
      %1285 = vmatpush2.msra.mxu0 0.0
      %1286 = vmatprep.subr.mxu0 0.0
      %1287 = vmatpush2.msra.mxu0 0.0
      %1288 = vmatprep.subr.mxu0 0.0
      %1289 = vmatpush2.msra.mxu0 0.0
      %1290 = vmatprep.subr.mxu0 0.0
      %1291 = vmatpush2.msra.mxu0 0.0
      %1292 = vmatprep.subr.mxu0 0.0
      %1293 = vmatpush2.msra.mxu0 0.0
      %1294 = vmatprep.subr.mxu0 0.0
      %1295 = vmatpush2.msra.mxu0 0.0
      %1296 = vmatprep.subr.mxu0 0.0
      %1297 = vmatpush2.msra.mxu0 0.0
      %1298 = vmatprep.subr.mxu0 0.0
      %1299 = vmatpush2.msra.mxu0 0.0
      %1300 = vmatprep.subr.mxu0 0.0
      %1301 = vmatpush2.msra.mxu0 0.0
      %1302 = vmatprep.subr.mxu0 0.0
      %1303 = vmatpush2.msra.mxu0 0.0
      %1304 = vmatprep.subr.mxu0 0.0
      %1305 = vmatpush2.msra.mxu0 0.0
      %1306 = vmatprep.subr.mxu0 0.0
      %1307 = vmatpush2.msra.mxu0 0.0
      %1308 = vmatprep.subr.mxu0 0.0
      %1309 = vmatpush2.msra.mxu0 0.0
      %1310 = vmatprep.subr.mxu0 0.0
      %1311 = vmatpush2.msra.mxu0 0.0
      %1312 = vmatprep.subr.mxu0 0.0
      %1313 = vmatpush2.msra.mxu0 0.0
      %1314 = vmatprep.mubr.f32.mxu0 0.0
      %1315 = vmatmul.mubr.f32.gmra.mxu0 %v1107
      %v1316 = vpop.f32.mrf.mxu0
      %v1317 = vadd.f32 0.0, %v1316
      %v1318 = vpop.f32.mrf.mxu0
      %1319 = vmatprep.mubr.f32.mxu0 0.0
      %1320 = vmatmul.mubr.f32.gmra.mxu0 %v1110
      %v1321 = vpop.f32.mrf.mxu0
      %v1322 = vadd.f32 0.0, %v1321
      %v1323 = vpop.f32.mrf.mxu0
      %1324 = vmatprep.mubr.f32.mxu0 0.0
      %1325 = vmatmul.mubr.f32.gmra.mxu0 %v1113
      %v1326 = vpop.f32.mrf.mxu0
      %v1327 = vadd.f32 0.0, %v1326
      %v1328 = vpop.f32.mrf.mxu0
      %1329 = vmatprep.mubr.f32.mxu0 0.0
      %1330 = vmatmul.mubr.f32.gmra.mxu0 %v1116
      %v1331 = vpop.f32.mrf.mxu0
      %v1332 = vadd.f32 0.0, %v1331
      %v1333 = vpop.f32.mrf.mxu0
      %1334 = vmatprep.mubr.f32.mxu0 0.0
      %1335 = vmatmul.mubr.f32.gmra.mxu0 %v1119
      %v1336 = vpop.f32.mrf.mxu0
      %v1337 = vadd.f32 0.0, %v1336
      %v1338 = vpop.f32.mrf.mxu0
      %1339 = vmatprep.mubr.f32.mxu0 0.0
      %1340 = vmatmul.mubr.f32.gmra.mxu0 %v1122
      %v1341 = vpop.f32.mrf.mxu0
      %v1342 = vadd.f32 0.0, %v1341
      %v1343 = vpop.f32.mrf.mxu0
      %1344 = vmatprep.mubr.f32.mxu0 0.0
      %1345 = vmatmul.mubr.f32.gmra.mxu0 %v1125
      %v1346 = vpop.f32.mrf.mxu0
      %v1347 = vadd.f32 0.0, %v1346
      %v1348 = vpop.f32.mrf.mxu0
      %1349 = vmatprep.mubr.f32.mxu0 0.0
      %1350 = vmatmul.mubr.f32.gmra.mxu0 %v1128
      %v1351 = vpop.f32.mrf.mxu0
      %v1352 = vadd.f32 0.0, %v1351
      %v1353 = vpop.f32.mrf.mxu0
      %1354 = vmatprep.mubr.f32.mxu0 0.0
      %1355 = vmatmul.mubr.f32.gmra.mxu0 %v1131
      %v1356 = vpop.f32.mrf.mxu0
      %v1357 = vadd.f32 0.0, %v1356
      %v1358 = vpop.f32.mrf.mxu0
      %1359 = vmatprep.mubr.f32.mxu0 0.0
      %1360 = vmatmul.mubr.f32.gmra.mxu0 %v1134
      %v1361 = vpop.f32.mrf.mxu0
      %v1362 = vadd.f32 0.0, %v1361
      %v1363 = vpop.f32.mrf.mxu0
      %1364 = vmatprep.mubr.f32.mxu0 0.0
      %1365 = vmatmul.mubr.f32.gmra.mxu0 %v1137
      %v1366 = vpop.f32.mrf.mxu0
      %v1367 = vadd.f32 0.0, %v1366
      %v1368 = vpop.f32.mrf.mxu0
      %1369 = vmatprep.mubr.f32.mxu0 0.0
      %1370 = vmatmul.mubr.f32.gmra.mxu0 %v1140
      %v1371 = vpop.f32.mrf.mxu0
      %v1372 = vadd.f32 0.0, %v1371
      %v1373 = vpop.f32.mrf.mxu0
      %1374 = vmatprep.mubr.f32.mxu0 0.0
      %1375 = vmatmul.mubr.f32.gmra.mxu0 %v1143
      %v1376 = vpop.f32.mrf.mxu0
      %v1377 = vadd.f32 0.0, %v1376
      %v1378 = vpop.f32.mrf.mxu0
      %1379 = vmatprep.mubr.f32.mxu0 0.0
      %1380 = vmatmul.mubr.f32.gmra.mxu0 %v1146
      %v1381 = vpop.f32.mrf.mxu0
      %v1382 = vadd.f32 0.0, %v1381
      %v1383 = vpop.f32.mrf.mxu0
      %1384 = vmatprep.mubr.f32.mxu0 0.0
      %1385 = vmatmul.mubr.f32.gmra.mxu0 %v1149
      %v1386 = vpop.f32.mrf.mxu0
      %v1387 = vadd.f32 0.0, %v1386
      %v1388 = vpop.f32.mrf.mxu0
      %1389 = vmatprep.mubr.f32.mxu0 0.0
      %1390 = vmatmul.mubr.f32.gmra.mxu0 %v1152
      %v1391 = vpop.f32.mrf.mxu0
      %v1392 = vadd.f32 0.0, %v1391
      %v1393 = vpop.f32.mrf.mxu0
      %1394 = vmatprep.mubr.f32.mxu0 0.0
      %1395 = vmatmul.mubr.f32.gmra.mxu0 %v1155
      %v1396 = vpop.f32.mrf.mxu0
      %v1397 = vadd.f32 0.0, %v1396
      %v1398 = vpop.f32.mrf.mxu0
      %1399 = vmatprep.mubr.f32.mxu0 0.0
      %1400 = vmatmul.mubr.f32.gmra.mxu0 %v1158
      %v1401 = vpop.f32.mrf.mxu0
      %v1402 = vadd.f32 0.0, %v1401
      %v1403 = vpop.f32.mrf.mxu0
      %1404 = vmatprep.mubr.f32.mxu0 0.0
      %1405 = vmatmul.mubr.f32.gmra.mxu0 %v1161
      %v1406 = vpop.f32.mrf.mxu0
      %v1407 = vadd.f32 0.0, %v1406
      %v1408 = vpop.f32.mrf.mxu0
      %1409 = vmatprep.mubr.f32.mxu0 0.0
      %1410 = vmatmul.mubr.f32.gmra.mxu0 %v1164
      %v1411 = vpop.f32.mrf.mxu0
      %v1412 = vadd.f32 0.0, %v1411
      %v1413 = vpop.f32.mrf.mxu0
      %1414 = vmatprep.mubr.f32.mxu0 0.0
      %1415 = vmatmul.mubr.f32.gmra.mxu0 %v1167
      %v1416 = vpop.f32.mrf.mxu0
      %v1417 = vadd.f32 0.0, %v1416
      %v1418 = vpop.f32.mrf.mxu0
      %1419 = vmatprep.mubr.f32.mxu0 0.0
      %1420 = vmatmul.mubr.f32.gmra.mxu0 %v1170
      %v1421 = vpop.f32.mrf.mxu0
      %v1422 = vadd.f32 0.0, %v1421
      %v1423 = vpop.f32.mrf.mxu0
      %1424 = vmatprep.mubr.f32.mxu0 0.0
      %1425 = vmatmul.mubr.f32.gmra.mxu0 %v1173
      %v1426 = vpop.f32.mrf.mxu0
      %v1427 = vadd.f32 0.0, %v1426
      %v1428 = vpop.f32.mrf.mxu0
      %1429 = vmatprep.mubr.f32.mxu0 0.0
      %1430 = vmatmul.mubr.f32.gmra.mxu0 %v1176
      %v1431 = vpop.f32.mrf.mxu0
      %v1432 = vadd.f32 0.0, %v1431
      %v1433 = vpop.f32.mrf.mxu0
      %1434 = vmatprep.mubr.f32.mxu0 0.0
      %1435 = vmatmul.mubr.f32.gmra.mxu0 %v1179
      %v1436 = vpop.f32.mrf.mxu0
      %v1437 = vadd.f32 0.0, %v1436
      %v1438 = vpop.f32.mrf.mxu0
      %1439 = vmatprep.mubr.f32.mxu0 0.0
      %1440 = vmatmul.mubr.f32.gmra.mxu0 %v1182
      %v1441 = vpop.f32.mrf.mxu0
      %v1442 = vadd.f32 0.0, %v1441
      %v1443 = vpop.f32.mrf.mxu0
      %1444 = vmatprep.mubr.f32.mxu0 0.0
      %1445 = vmatmul.mubr.f32.gmra.mxu0 %v1185
      %v1446 = vpop.f32.mrf.mxu0
      %v1447 = vadd.f32 0.0, %v1446
      %v1448 = vpop.f32.mrf.mxu0
      %1449 = vmatprep.mubr.f32.mxu0 0.0
      %1450 = vmatmul.mubr.f32.gmra.mxu0 %v1188
      %v1451 = vpop.f32.mrf.mxu0
      %v1452 = vadd.f32 0.0, %v1451
      %v1453 = vpop.f32.mrf.mxu0
      %1454 = vmatprep.mubr.f32.mxu0 0.0
      %1455 = vmatmul.mubr.f32.gmra.mxu0 %v1191
      %v1456 = vpop.f32.mrf.mxu0
      %v1457 = vadd.f32 0.0, %v1456
      %v1458 = vpop.f32.mrf.mxu0
      %1459 = vmatprep.mubr.f32.mxu0 0.0
      %1460 = vmatmul.mubr.f32.gmra.mxu0 %v1194
      %v1461 = vpop.f32.mrf.mxu0
      %v1462 = vadd.f32 0.0, %v1461
      %v1463 = vpop.f32.mrf.mxu0
      %1464 = vmatprep.mubr.f32.mxu0 0.0
      %1465 = vmatmul.mubr.f32.gmra.mxu0 %v1197
      %v1466 = vpop.f32.mrf.mxu0
      %v1467 = vadd.f32 0.0, %v1466
      %v1468 = vpop.f32.mrf.mxu0
      %1469 = vmatprep.mubr.f32.mxu0 0.0
      %1470 = vmatmul.mubr.f32.gmra.mxu0 %v1200
      %v1471 = vpop.f32.mrf.mxu0
      %v1472 = vadd.f32 0.0, %v1471
      %v1473 = vpop.f32.mrf.mxu0
      %1474 = vmatprep.mubr.f32.mxu0 0.0
      %1475 = vmatmul.mubr.f32.gmra.mxu0 %v1203
      %v1476 = vpop.f32.mrf.mxu0
      %v1477 = vadd.f32 0.0, %v1476
      %v1478 = vpop.f32.mrf.mxu0
      %1479 = vmatprep.mubr.f32.mxu0 0.0
      %1480 = vmatmul.mubr.f32.gmra.mxu0 %v1206
      %v1481 = vpop.f32.mrf.mxu0
      %v1482 = vadd.f32 0.0, %v1481
      %v1483 = vpop.f32.mrf.mxu0
      %1484 = vmatprep.mubr.f32.mxu0 0.0
      %1485 = vmatmul.mubr.f32.gmra.mxu0 %v1209
      %v1486 = vpop.f32.mrf.mxu0
      %v1487 = vadd.f32 0.0, %v1486
      %v1488 = vpop.f32.mrf.mxu0
      %1489 = vmatprep.mubr.f32.mxu0 0.0
      %1490 = vmatmul.mubr.f32.gmra.mxu0 %v1212
      %v1491 = vpop.f32.mrf.mxu0
      %v1492 = vadd.f32 0.0, %v1491
      %v1493 = vpop.f32.mrf.mxu0
      %1494 = vmatprep.mubr.f32.mxu0 0.0
      %1495 = vmatmul.mubr.f32.gmra.mxu0 %v1215
      %v1496 = vpop.f32.mrf.mxu0
      %v1497 = vadd.f32 0.0, %v1496
      %v1498 = vpop.f32.mrf.mxu0
      %1499 = vmatprep.mubr.f32.mxu0 0.0
      %1500 = vmatmul.mubr.f32.gmra.mxu0 %v1218
      %v1501 = vpop.f32.mrf.mxu0
      %v1502 = vadd.f32 0.0, %v1501
      %v1503 = vpop.f32.mrf.mxu0
      %1504 = vmatprep.mubr.f32.mxu0 0.0
      %1505 = vmatmul.mubr.f32.gmra.mxu0 %v1221
      %v1506 = vpop.f32.mrf.mxu0
      %v1507 = vadd.f32 0.0, %v1506
      %v1508 = vpop.f32.mrf.mxu0
      %1509 = vmatprep.mubr.f32.mxu0 0.0
      %1510 = vmatmul.mubr.f32.gmra.mxu0 %v1224
      %v1511 = vpop.f32.mrf.mxu0
      %v1512 = vadd.f32 0.0, %v1511
      %v1513 = vpop.f32.mrf.mxu0
      %1514 = vmatprep.mubr.f32.mxu0 0.0
      %1515 = vmatmul.mubr.f32.gmra.mxu0 %v1227
      %v1516 = vpop.f32.mrf.mxu0
      %v1517 = vadd.f32 0.0, %v1516
      %v1518 = vpop.f32.mrf.mxu0
      %1519 = vmatprep.mubr.f32.mxu0 0.0
      %1520 = vmatmul.mubr.f32.gmra.mxu0 %v1230
      %v1521 = vpop.f32.mrf.mxu0
      %v1522 = vadd.f32 0.0, %v1521
      %v1523 = vpop.f32.mrf.mxu0
      %1524 = vmatprep.mubr.f32.mxu0 0.0
      %1525 = vmatmul.mubr.f32.gmra.mxu0 %v1233
      %v1526 = vpop.f32.mrf.mxu0
      %v1527 = vadd.f32 0.0, %v1526
      %v1528 = vpop.f32.mrf.mxu0
      %1529 = vmatprep.mubr.f32.mxu0 0.0
      %1530 = vmatmul.mubr.f32.gmra.mxu0 %v1236
      %v1531 = vpop.f32.mrf.mxu0
      %v1532 = vadd.f32 0.0, %v1531
      %v1533 = vpop.f32.mrf.mxu0
      %1534 = vmatprep.mubr.f32.mxu0 0.0
      %1535 = vmatmul.mubr.f32.gmra.mxu0 %v1239
      %v1536 = vpop.f32.mrf.mxu0
      %v1537 = vadd.f32 0.0, %v1536
      %v1538 = vpop.f32.mrf.mxu0
      %1539 = vmatprep.mubr.f32.mxu0 0.0
      %1540 = vmatmul.mubr.f32.gmra.mxu0 %v1242
      %v1541 = vpop.f32.mrf.mxu0
      %v1542 = vadd.f32 0.0, %v1541
      %v1543 = vpop.f32.mrf.mxu0
      %1544 = vmatprep.mubr.f32.mxu0 0.0
      %1545 = vmatmul.mubr.f32.gmra.mxu0 %v1245
      %v1546 = vpop.f32.mrf.mxu0
      %v1547 = vadd.f32 0.0, %v1546
      %v1548 = vpop.f32.mrf.mxu0
      %1549 = vmatprep.mubr.f32.mxu0 0.0
      %1550 = vmatmul.mubr.f32.gmra.mxu0 %v1248
      %v1551 = vpop.f32.mrf.mxu0
      %v1552 = vadd.f32 0.0, %v1551
      %v1553 = vpop.f32.mrf.mxu0
      %1554 = vdwg.mxu0
      %v1555 = vadd.f32 %v1397, 1e-06
      %v1556 = vadd.f32 %v1402, 1e-06
      %v1557 = vadd.f32 %v1407, 1e-06
      %v1558 = vadd.f32 %v1412, 1e-06
      %v1559 = vadd.f32 %v1417, 1e-06
      %v1560 = vadd.f32 %v1422, 1e-06
      %v1561 = vadd.f32 %v1427, 1e-06
      %v1562 = vadd.f32 %v1432, 1e-06
      %v1563 = vadd.f32 %v1437, 1e-06
      %v1564 = vadd.f32 %v1442, 1e-06
      %v1565 = vadd.f32 %v1447, 1e-06
      %v1566 = vadd.f32 %v1452, 1e-06
      %v1567 = vadd.f32 %v1457, 1e-06
      %v1568 = vadd.f32 %v1462, 1e-06
      %v1569 = vadd.f32 %v1467, 1e-06
      %v1570 = vadd.f32 %v1472, 1e-06
      %v1571 = vadd.f32 %v1477, 1e-06
      %v1572 = vadd.f32 %v1482, 1e-06
      %v1573 = vadd.f32 %v1487, 1e-06
      %v1574 = vadd.f32 %v1492, 1e-06
      %v1575 = vadd.f32 %v1497, 1e-06
      %v1576 = vadd.f32 %v1502, 1e-06
      %v1577 = vadd.f32 %v1507, 1e-06
      %v1578 = vadd.f32 %v1512, 1e-06
      %v1579 = vadd.f32 %v1517, 1e-06
      %v1580 = vadd.f32 %v1522, 1e-06
      %v1581 = vadd.f32 %v1527, 1e-06
      %v1582 = vadd.f32 %v1532, 1e-06
      %v1583 = vadd.f32 %v1537, 1e-06
      %v1584 = vadd.f32 %v1542, 1e-06
      %v1585 = vadd.f32 %v1547, 1e-06
      %v1586 = vadd.f32 %v1552, 1e-06
      %v1587 = vmul.f32 %v1555, %v1571
      %v1588 = vmul.f32 %v1556, %v1572
      %v1589 = vmul.f32 %v1557, %v1573
      %v1590 = vmul.f32 %v1558, %v1574
      %v1591 = vmul.f32 %v1559, %v1575
      %v1592 = vmul.f32 %v1560, %v1576
      %v1593 = vmul.f32 %v1561, %v1577
      %v1594 = vmul.f32 %v1562, %v1578
      %v1595 = vmul.f32 %v1563, %v1579
      %v1596 = vmul.f32 %v1564, %v1580
      %v1597 = vmul.f32 %v1565, %v1581
      %v1598 = vmul.f32 %v1566, %v1582
      %v1599 = vmul.f32 %v1567, %v1583
      %v1600 = vmul.f32 %v1568, %v1584
      %v1601 = vmul.f32 %v1569, %v1585
      %v1602 = vmul.f32 %v1570, %v1586
      %v1603 = vrsqrt.pop %v1587
      %v1604 = vrsqrt.pop %v1588
      %v1605 = vrsqrt.pop %v1589
      %v1606 = vrsqrt.pop %v1590
      %v1607 = vrsqrt.pop %v1591
      %v1608 = vrsqrt.pop %v1592
      %v1609 = vrsqrt.pop %v1593
      %v1610 = vrsqrt.pop %v1594
      %v1611 = vrsqrt.pop %v1595
      %v1612 = vrsqrt.pop %v1596
      %v1613 = vrsqrt.pop %v1597
      %v1614 = vrsqrt.pop %v1598
      %v1615 = vrsqrt.pop %v1599
      %v1616 = vrsqrt.pop %v1600
      %v1617 = vrsqrt.pop %v1601
      %v1618 = vrsqrt.pop %v1602
      %v1619 = vmul.f32 %v1317, %v1603
      %v1620 = vmul.f32 %v1322, %v1604
      %v1621 = vmul.f32 %v1327, %v1605
      %v1622 = vmul.f32 %v1332, %v1606
      %v1623 = vmul.f32 %v1337, %v1607
      %v1624 = vmul.f32 %v1342, %v1608
      %v1625 = vmul.f32 %v1347, %v1609
      %v1626 = vmul.f32 %v1352, %v1610
      %v1627 = vmul.f32 %v1357, %v1611
      %v1628 = vmul.f32 %v1362, %v1612
      %v1629 = vmul.f32 %v1367, %v1613
      %v1630 = vmul.f32 %v1372, %v1614
      %v1631 = vmul.f32 %v1377, %v1615
      %v1632 = vmul.f32 %v1382, %v1616
      %v1633 = vmul.f32 %v1387, %v1617
      %v1634 = vmul.f32 %v1392, %v1618
      %1635 = vst [vmem:[#allocation5] sm:$0xff] %v1619
      %1636 = vst [vmem:[#allocation5 + $0x8] sm:$0xff] %v1620
      %1637 = vst [vmem:[#allocation5 + $0x10] sm:$0xff] %v1621
      %1638 = vst [vmem:[#allocation5 + $0x18] sm:$0xff] %v1622
      %1639 = vst [vmem:[#allocation5 + $0x20] sm:$0xff] %v1623
      %1640 = vst [vmem:[#allocation5 + $0x28] sm:$0xff] %v1624
      %1641 = vst [vmem:[#allocation5 + $0x30] sm:$0xff] %v1625
      %1642 = vst [vmem:[#allocation5 + $0x38] sm:$0xff] %v1626
      %1643 = vst [vmem:[#allocation5 + $0x40] sm:$0xff] %v1627
      %1644 = vst [vmem:[#allocation5 + $0x48] sm:$0xff] %v1628
      %1645 = vst [vmem:[#allocation5 + $0x50] sm:$0xff] %v1629
      %1646 = vst [vmem:[#allocation5 + $0x58] sm:$0xff] %v1630
      %1647 = vst [vmem:[#allocation5 + $0x60] sm:$0xff] %v1631
      %1648 = vst [vmem:[#allocation5 + $0x68] sm:$0xff] %v1632
      %1649 = vst [vmem:[#allocation5 + $0x70] sm:$0xff] %v1633
      %1650 = vst [vmem:[#allocation5 + $0x78] sm:$0xff] %v1634
    $region45: #{tpu_custom_call.1} parent=1 // pred_fallthru
      _
    // Predicated region
    $region46: #{tpu_custom_call.1} parent=1 // pred_check
      _
    $region47: #{tpu_custom_call.1} parent=1 // pred_check_branch
      %1652 = sbr.rel (0) target = $region49
    $region48: #{tpu_custom_call.1} parent=1 // pred_region
      %s1654 = ssub.s32 384, 384
      %1655 = vsyncadd [#allocation4], %s1654
      %s1656 = sshll.u32 [#allocation3], 4
      %s1657 = int_to_ptr.vmem [resolvable:$true] %s1656
      %1662 = dma.vmem_to_hbm [thread:$0]  %s1657, 384, %s9, [#allocation4], 128, 128, 8
    $region49: #{tpu_custom_call.1} parent=1 // pred_fallthru
      _
    // Predicated region
    $region50: #{tpu_custom_call.1} parent=1 // pred_check
      _
    $region51: #{tpu_custom_call.1} parent=1 // pred_check_branch
      %1664 = sbr.rel (0) target = $region53
    $region52: #{tpu_custom_call.1} parent=1 // pred_region
      %s1666 = ssub.s32 2048, 2048
      %1667 = vsyncadd [#allocation6], %s1666
      %s1668 = sshll.u32 [#allocation5], 4
      %s1669 = int_to_ptr.vmem [resolvable:$true] %s1668
      %1674 = dma.vmem_to_hbm [thread:$0]  %s1669, 2048, %s10, [#allocation6], 128, 128, 8
    $region53: #{tpu_custom_call.1} parent=1 // pred_fallthru
      _
    // Predicated region
    $region54: #{tpu_custom_call.1} parent=1 // pred_check
      _
    $region55: #{tpu_custom_call.1} parent=1 // pred_check_branch
      %1676 = sbr.rel (0) target = $region57
    $region56: #{tpu_custom_call.1} parent=1 // pred_region
      %1677 = dma.done [#allocation4], 384
    $region57: #{tpu_custom_call.1} parent=1 // pred_fallthru
      _
    // Predicated region
    $region58: #{tpu_custom_call.1} parent=1 // pred_check
      _
    $region59: #{tpu_custom_call.1} parent=1 // pred_check_branch
      %1679 = sbr.rel (0) target = $region61
    $region60: #{tpu_custom_call.1} parent=1 // pred_region
      %1680 = dma.done [#allocation6], 2048
    $region61: #{tpu_custom_call.1} parent=1 // pred_fallthru
      _
    %1681 = vsyncpa [#allocation4], 1
    %1682 = vsyncpa [#allocation6], 1

</llo_original>
